<compile_context>
chip_gen: v5e
topology: v5e:2x2
jax: 0.10.0
libtpu: 0.0.40
codegen_flags: <defaults>
</compile_context>

<pallas_src>
import functools
import math

import jax
import jax.numpy as jnp
from jax import lax
from jax.experimental import pallas as pl
from jax.experimental.pallas import tpu as pltpu


def _round_up(v, m):
    return ((v + m - 1) // m) * m


def _pick_row_tile(H, W, max_rows=128):
    """Largest divisor tH of H with tH*W <= max_rows and tH*W % 8 == 0."""
    best = H                      # fallback: whole image in one tile (legal block)
    for t in range(1, H + 1):
        if H % t == 0 and t * W <= max_rows and (t * W) % 8 == 0:
            best = t
    return best


# ----------------------------- Pallas kernel -------------------------------

def _aspp_kernel(x_ref, w_ref, b_ref, o_ref, pad_ref, col_ref, *,
                 rate, H, W, tH):
    """One (batch, row-tile) grid step of dilated-3x3 conv + folded BN.

    x_ref:   (1, H, W, Cin)        bf16  un-padded NHWC image (constant over r)
    w_ref:   (9*Cin, Np)           bf16  BN-folded weights, tap-major rows
    b_ref:   (1, Np)               f32   BN-folded bias
    o_ref:   (1, tH*W, Np)         bf16  flattened, lane-dense output rows
    pad_ref: (H+2r, W+2r, Cin)     bf16  VMEM scratch: zero-padded image
    col_ref: (tH*W, 9*Cin)         bf16  VMEM scratch: K-fused im2col block
    """
    r = pl.program_id(1)
    cin = x_ref.shape[-1]
    M = tH * W

    # Build the zero-padded image in VMEM once per batch element (replaces the
    # wrapper-side jnp.pad HBM round trip).
    @pl.when(r == 0)
    def _():
        pad_ref[...] = jnp.zeros_like(pad_ref)
        pad_ref[rate:rate + H, rate:rate + W, :] = x_ref[0]

    # Stage the 9 dilated taps of this row tile side by side along K
    # (im2col-in-VMEM): one staging copy per tap, then a single K = 9*Cin
    # matmul instead of nine K = Cin matmuls.
    row0 = pl.multiple_of(r * tH, tH)
    for t in range(9):
        ki, kj = divmod(t, 3)
        win = pad_ref[pl.ds(row0 + ki * rate, tH),
                      kj * rate:kj * rate + W, :]
        col_ref[:, t * cin:(t + 1) * cin] = win.reshape(M, cin)

    acc = jnp.dot(col_ref[...], w_ref[...],
                  preferred_element_type=jnp.float32)        # (M, Np) f32
    acc = acc + b_ref[...]                                   # bias broadcast
    o_ref[...] = acc.reshape(1, M, o_ref.shape[-1]).astype(o_ref.dtype)


# ----------------------------- wrapper --------------------------------------

def aspp_forward(params, x_nchw, rate):
    w, b_conv, gamma, beta, mean, var = (
        params[k] for k in ("w", "b", "gamma", "beta", "mean", "var"))
    planes, cin = w.shape[0], w.shape[1]
    B, C, H, W = x_nchw.shape
    assert C == cin

    # ---- fold BatchNorm (eval-mode running stats) into the conv ------------
    eps = 1e-5
    scale = gamma / jnp.sqrt(var + eps)                       # (planes,)
    w_f = w * scale[:, None, None, None]                      # (planes,cin,3,3)
    b_f = (b_conv - mean) * scale + beta                      # (planes,)

    # ---- tap-major (K = 9*Cin) weight matrix, lane-padded out channels -----
    npad = _round_up(planes, 128)
    w_mat = jnp.transpose(w_f, (2, 3, 1, 0)).reshape(9 * cin, planes)
    w_mat = jnp.pad(w_mat, ((0, 0), (0, npad - planes))).astype(jnp.bfloat16)
    b_pad = jnp.pad(b_f, (0, npad - planes)).reshape(1, npad).astype(jnp.float32)

    # ---- NCHW -> NHWC bf16 (MXU operand layout).  Spatial zero-padding is
    # done inside the kernel, not as an HBM pass here. ------------------------
    # TODO(synk): an NHWC-bf16 module boundary would remove this transpose and
    # the final NHWC->NCHW transpose (two more HBM passes) if the surrounding
    # network used NHWC.
    x = jnp.transpose(x_nchw, (0, 2, 3, 1)).astype(jnp.bfloat16)
    Hp, Wp = H + 2 * rate, W + 2 * rate

    tH = _pick_row_tile(H, W)          # tH*W output rows per grid step
    nr = H // tH

    out = pl.pallas_call(
        functools.partial(_aspp_kernel, rate=rate, H=H, W=W, tH=tH),
        out_shape=jax.ShapeDtypeStruct((B, H * W, npad), jnp.bfloat16),
        grid=(B, nr),
        in_specs=[
            pl.BlockSpec((1, H, W, cin), lambda b, r: (b, 0, 0, 0)),   # image
            pl.BlockSpec((9 * cin, npad), lambda b, r: (0, 0)),        # weights
            pl.BlockSpec((1, npad), lambda b, r: (0, 0)),              # bias
        ],
        out_specs=pl.BlockSpec((1, tH * W, npad), lambda b, r: (b, r, 0)),
        scratch_shapes=[
            pltpu.VMEM((Hp, Wp, cin), jnp.bfloat16),       # padded image
            pltpu.VMEM((tH * W, 9 * cin), jnp.bfloat16),   # im2col block
        ],
        compiler_params=pltpu.CompilerParams(
            # Batch axis can shard across v7x megacores; the row axis must be
            # "arbitrary" so the padded-image scratch (filled at r == 0) is
            # reused sequentially by the remaining row tiles of that batch.
            dimension_semantics=("parallel", "arbitrary"),
        ),
    )(x, w_mat, b_pad)

    out = out.reshape(B, H, W, npad)[..., :planes]           # drop lane pad
    return jnp.transpose(out, (0, 3, 1, 2)).astype(jnp.float32)  # NHWC -> NCHW


# ----------------------------- params / reference ---------------------------

def init_params(key, inplanes, planes):
    ks = jax.random.split(key, 6)
    fan = inplanes * 9
    w = jax.random.normal(ks[0], (planes, inplanes, 3, 3), jnp.float32) / math.sqrt(fan)
    b = 0.1 * jax.random.normal(ks[1], (planes,), jnp.float32)
    gamma = 1.0 + 0.1 * jax.random.normal(ks[2], (planes,), jnp.float32)
    beta = 0.1 * jax.random.normal(ks[3], (planes,), jnp.float32)
    mean = 0.1 * jax.random.normal(ks[4], (planes,), jnp.float32)
    var = 1.0 + 0.1 * jnp.abs(jax.random.normal(ks[5], (planes,), jnp.float32))
    return dict(w=w, b=b, gamma=gamma, beta=beta, mean=mean, var=var)


def _reference(params, x_nchw, rate):
    """Pure-JAX reference with the same bf16 operand rounding + eval-mode BN."""
    eps = 1e-5
    w, b_conv, gamma, beta, mean, var = (
        params[k] for k in ("w", "b", "gamma", "beta", "mean", "var"))
    scale = gamma / jnp.sqrt(var + eps)
    w_f = (w * scale[:, None, None, None]).astype(jnp.bfloat16).astype(jnp.float32)
    b_f = (b_conv - mean) * scale + beta
    x = jnp.transpose(x_nchw, (0, 2, 3, 1)).astype(jnp.bfloat16).astype(jnp.float32)
    w_hwio = jnp.transpose(w_f, (2, 3, 1, 0))                 # (3,3,Cin,planes)
    y = lax.conv_general_dilated(
        x, w_hwio, window_strides=(1, 1),
        padding=[(rate, rate), (rate, rate)],
        rhs_dilation=(rate, rate),
        dimension_numbers=("NHWC", "HWIO", "NHWC"),
        precision=lax.Precision.HIGHEST)
    y = y + b_f
    return jnp.transpose(y, (0, 3, 1, 2))


# ----------------------------- main ------------------------------------------

if __name__ == "__main__":
    key = jax.random.PRNGKey(0)
    pkey, xkey = jax.random.split(key)
    inplanes, planes, rate = 128, 64, 2
    B, H, W = 2, 16, 16

    params = init_params(pkey, inplanes, planes)
    x = jax.random.normal(xkey, (B, inplanes, H, W), jnp.float32)

    fwd = jax.jit(functools.partial(aspp_forward, rate=rate))
    out = jax.block_until_ready(fwd(params, x))

    assert out.shape == (B, planes, H, W), out.shape
    assert bool(jnp.all(jnp.isfinite(out)))

    ref = _reference(params, x, rate)
    assert bool(jnp.allclose(out, ref, atol=2e-2, rtol=2e-2)), \
        float(jnp.max(jnp.abs(out - ref)))

    print("KERNEL_OK")
</pallas_src>

<mosaic_0001>
module attributes {stable_mosaic.version = 11 : i64} {
  func.func @_aspp_kernel(%arg0: i32, %arg1: i32, %arg2: memref<1x16x16x128xbf16, #tpu.memory_space<vmem>>, %arg3: memref<1152x128xbf16, #tpu.memory_space<vmem>>, %arg4: memref<1x128xf32, #tpu.memory_space<vmem>>, %arg5: memref<1x128x128xbf16, #tpu.memory_space<vmem>>, %arg6: memref<20x20x128xbf16, #tpu.memory_space<vmem>>, %arg7: memref<128x1152xbf16, #tpu.memory_space<vmem>>) attributes {dimension_semantics = [#tpu.dimension_semantics<parallel>, #tpu.dimension_semantics<arbitrary>], iteration_bounds = array<i64: 2, 2>, scalar_prefetch = 0 : i64, scratch_operands = 2 : i64, tpu.core_type = #tpu.core_type<tc>, window_params = [{transform_indices = @transform_0, window_bounds = array<i64: 1, 16, 16, 128>}, {pipeline_mode = #tpu.pipeline_mode<synchronous>, transform_indices = @transform_1, window_bounds = array<i64: 1152, 128>}, {pipeline_mode = #tpu.pipeline_mode<synchronous>, transform_indices = @transform_2, window_bounds = array<i64: 1, 128>}, {transform_indices = @transform_3, window_bounds = array<i64: 1, 128, 128>}]} {
    %c0_i32 = arith.constant 0 : i32
    %0 = arith.cmpi eq, %arg1, %c0_i32 : i32
    %1 = arith.extui %0 : i1 to i32
    %c0_i32_0 = arith.constant 0 : i32
    %2 = arith.cmpi ne, %1, %c0_i32_0 : i32
    scf.if %2 {
      %cst_42 = arith.constant 0.000000e+00 : bf16
      %59 = vector.broadcast %cst_42 : bf16 to vector<20x20x128xbf16>
      %c0_43 = arith.constant 0 : index
      %c0_44 = arith.constant 0 : index
      %c0_45 = arith.constant 0 : index
      %60 = vector.load %arg6[%c0_43, %c0_44, %c0_45] : memref<20x20x128xbf16, #tpu.memory_space<vmem>>, vector<20x20x128xbf16>
      tpu.vector_store %arg6[%c0_43, %c0_44, %c0_45], %59 {strides = array<i32>} : memref<20x20x128xbf16, #tpu.memory_space<vmem>>, vector<20x20x128xbf16>,
      %c0_46 = arith.constant 0 : index
      %c0_47 = arith.constant 0 : index
      %c0_48 = arith.constant 0 : index
      %c0_49 = arith.constant 0 : index
      %61 = vector.load %arg2[%c0_46, %c0_47, %c0_48, %c0_49] : memref<1x16x16x128xbf16, #tpu.memory_space<vmem>>, vector<1x16x16x128xbf16>
      %62 = vector.shape_cast %61 : vector<1x16x16x128xbf16> to vector<16x16x128xbf16>
      %c2_50 = arith.constant 2 : index
      %c2_51 = arith.constant 2 : index
      %c0_52 = arith.constant 0 : index
      %63 = vector.load %arg6[%c2_50, %c2_51, %c0_52] : memref<20x20x128xbf16, #tpu.memory_space<vmem>>, vector<16x16x128xbf16>
      tpu.vector_store %arg6[%c2_50, %c2_51, %c0_52], %62 {strides = array<i32>} : memref<20x20x128xbf16, #tpu.memory_space<vmem>>, vector<16x16x128xbf16>,
    } else {
    }
    %c8_i32 = arith.constant 8 : i32
    %3 = arith.muli %arg1, %c8_i32 : i32
    %4 = tpu.assume_multiple %3, 8 : i32
    %c0_i32_1 = arith.constant 0 : i32
    %5 = arith.addi %4, %c0_i32_1 : i32
    %6 = arith.index_cast %5 : i32 to index
    %c0 = arith.constant 0 : index
    %c0_2 = arith.constant 0 : index
    %7 = vector.load %arg6[%6, %c0, %c0_2] : memref<20x20x128xbf16, #tpu.memory_space<vmem>>, vector<8x16x128xbf16>
    %8 = vector.shape_cast %7 : vector<8x16x128xbf16> to vector<128x128xbf16>
    %c0_3 = arith.constant 0 : index
    %c0_4 = arith.constant 0 : index
    %9 = vector.load %arg7[%c0_3, %c0_4] : memref<128x1152xbf16, #tpu.memory_space<vmem>>, vector<128x128xbf16>
    tpu.vector_store %arg7[%c0_3, %c0_4], %8 {strides = array<i32>} : memref<128x1152xbf16, #tpu.memory_space<vmem>>, vector<128x128xbf16>,
    %c0_i32_5 = arith.constant 0 : i32
    %10 = arith.addi %4, %c0_i32_5 : i32
    %11 = arith.index_cast %10 : i32 to index
    %c2 = arith.constant 2 : index
    %c0_6 = arith.constant 0 : index
    %12 = vector.load %arg6[%11, %c2, %c0_6] : memref<20x20x128xbf16, #tpu.memory_space<vmem>>, vector<8x16x128xbf16>
    %13 = vector.shape_cast %12 : vector<8x16x128xbf16> to vector<128x128xbf16>
    %c0_7 = arith.constant 0 : index
    %c128 = arith.constant 128 : index
    %14 = vector.load %arg7[%c0_7, %c128] : memref<128x1152xbf16, #tpu.memory_space<vmem>>, vector<128x128xbf16>
    tpu.vector_store %arg7[%c0_7, %c128], %13 {strides = array<i32>} : memref<128x1152xbf16, #tpu.memory_space<vmem>>, vector<128x128xbf16>,
    %c0_i32_8 = arith.constant 0 : i32
    %15 = arith.addi %4, %c0_i32_8 : i32
    %16 = arith.index_cast %15 : i32 to index
    %c4 = arith.constant 4 : index
    %c0_9 = arith.constant 0 : index
    %17 = vector.load %arg6[%16, %c4, %c0_9] : memref<20x20x128xbf16, #tpu.memory_space<vmem>>, vector<8x16x128xbf16>
    %18 = vector.shape_cast %17 : vector<8x16x128xbf16> to vector<128x128xbf16>
    %c0_10 = arith.constant 0 : index
    %c256 = arith.constant 256 : index
    %19 = vector.load %arg7[%c0_10, %c256] : memref<128x1152xbf16, #tpu.memory_space<vmem>>, vector<128x128xbf16>
    tpu.vector_store %arg7[%c0_10, %c256], %18 {strides = array<i32>} : memref<128x1152xbf16, #tpu.memory_space<vmem>>, vector<128x128xbf16>,
    %c2_i32 = arith.constant 2 : i32
    %20 = arith.addi %4, %c2_i32 : i32
    %21 = arith.index_cast %20 : i32 to index
    %c0_11 = arith.constant 0 : index
    %c0_12 = arith.constant 0 : index
    %22 = vector.load %arg6[%21, %c0_11, %c0_12] : memref<20x20x128xbf16, #tpu.memory_space<vmem>>, vector<8x16x128xbf16>
    %23 = vector.shape_cast %22 : vector<8x16x128xbf16> to vector<128x128xbf16>
    %c0_13 = arith.constant 0 : index
    %c384 = arith.constant 384 : index
    %24 = vector.load %arg7[%c0_13, %c384] : memref<128x1152xbf16, #tpu.memory_space<vmem>>, vector<128x128xbf16>
    tpu.vector_store %arg7[%c0_13, %c384], %23 {strides = array<i32>} : memref<128x1152xbf16, #tpu.memory_space<vmem>>, vector<128x128xbf16>,
    %c2_i32_14 = arith.constant 2 : i32
    %25 = arith.addi %4, %c2_i32_14 : i32
    %26 = arith.index_cast %25 : i32 to index
    %c2_15 = arith.constant 2 : index
    %c0_16 = arith.constant 0 : index
    %27 = vector.load %arg6[%26, %c2_15, %c0_16] : memref<20x20x128xbf16, #tpu.memory_space<vmem>>, vector<8x16x128xbf16>
    %28 = vector.shape_cast %27 : vector<8x16x128xbf16> to vector<128x128xbf16>
    %c0_17 = arith.constant 0 : index
    %c512 = arith.constant 512 : index
    %29 = vector.load %arg7[%c0_17, %c512] : memref<128x1152xbf16, #tpu.memory_space<vmem>>, vector<128x128xbf16>
    tpu.vector_store %arg7[%c0_17, %c512], %28 {strides = array<i32>} : memref<128x1152xbf16, #tpu.memory_space<vmem>>, vector<128x128xbf16>,
    %c2_i32_18 = arith.constant 2 : i32
    %30 = arith.addi %4, %c2_i32_18 : i32
    %31 = arith.index_cast %30 : i32 to index
    %c4_19 = arith.constant 4 : index
    %c0_20 = arith.constant 0 : index
    %32 = vector.load %arg6[%31, %c4_19, %c0_20] : memref<20x20x128xbf16, #tpu.memory_space<vmem>>, vector<8x16x128xbf16>
    %33 = vector.shape_cast %32 : vector<8x16x128xbf16> to vector<128x128xbf16>
    %c0_21 = arith.constant 0 : index
    %c640 = arith.constant 640 : index
    %34 = vector.load %arg7[%c0_21, %c640] : memref<128x1152xbf16, #tpu.memory_space<vmem>>, vector<128x128xbf16>
    tpu.vector_store %arg7[%c0_21, %c640], %33 {strides = array<i32>} : memref<128x1152xbf16, #tpu.memory_space<vmem>>, vector<128x128xbf16>,
    %c4_i32 = arith.constant 4 : i32
    %35 = arith.addi %4, %c4_i32 : i32
    %36 = arith.index_cast %35 : i32 to index
    %c0_22 = arith.constant 0 : index
    %c0_23 = arith.constant 0 : index
    %37 = vector.load %arg6[%36, %c0_22, %c0_23] : memref<20x20x128xbf16, #tpu.memory_space<vmem>>, vector<8x16x128xbf16>
    %38 = vector.shape_cast %37 : vector<8x16x128xbf16> to vector<128x128xbf16>
    %c0_24 = arith.constant 0 : index
    %c768 = arith.constant 768 : index
    %39 = vector.load %arg7[%c0_24, %c768] : memref<128x1152xbf16, #tpu.memory_space<vmem>>, vector<128x128xbf16>
    tpu.vector_store %arg7[%c0_24, %c768], %38 {strides = array<i32>} : memref<128x1152xbf16, #tpu.memory_space<vmem>>, vector<128x128xbf16>,
    %c4_i32_25 = arith.constant 4 : i32
    %40 = arith.addi %4, %c4_i32_25 : i32
    %41 = arith.index_cast %40 : i32 to index
    %c2_26 = arith.constant 2 : index
    %c0_27 = arith.constant 0 : index
    %42 = vector.load %arg6[%41, %c2_26, %c0_27] : memref<20x20x128xbf16, #tpu.memory_space<vmem>>, vector<8x16x128xbf16>
    %43 = vector.shape_cast %42 : vector<8x16x128xbf16> to vector<128x128xbf16>
    %c0_28 = arith.constant 0 : index
    %c896 = arith.constant 896 : index
    %44 = vector.load %arg7[%c0_28, %c896] : memref<128x1152xbf16, #tpu.memory_space<vmem>>, vector<128x128xbf16>
    tpu.vector_store %arg7[%c0_28, %c896], %43 {strides = array<i32>} : memref<128x1152xbf16, #tpu.memory_space<vmem>>, vector<128x128xbf16>,
    %c4_i32_29 = arith.constant 4 : i32
    %45 = arith.addi %4, %c4_i32_29 : i32
    %46 = arith.index_cast %45 : i32 to index
    %c4_30 = arith.constant 4 : index
    %c0_31 = arith.constant 0 : index
    %47 = vector.load %arg6[%46, %c4_30, %c0_31] : memref<20x20x128xbf16, #tpu.memory_space<vmem>>, vector<8x16x128xbf16>
    %48 = vector.shape_cast %47 : vector<8x16x128xbf16> to vector<128x128xbf16>
    %c0_32 = arith.constant 0 : index
    %c1024 = arith.constant 1024 : index
    %49 = vector.load %arg7[%c0_32, %c1024] : memref<128x1152xbf16, #tpu.memory_space<vmem>>, vector<128x128xbf16>
    tpu.vector_store %arg7[%c0_32, %c1024], %48 {strides = array<i32>} : memref<128x1152xbf16, #tpu.memory_space<vmem>>, vector<128x128xbf16>,
    %c0_33 = arith.constant 0 : index
    %c0_34 = arith.constant 0 : index
    %50 = vector.load %arg7[%c0_33, %c0_34] : memref<128x1152xbf16, #tpu.memory_space<vmem>>, vector<128x1152xbf16>
    %c0_35 = arith.constant 0 : index
    %c0_36 = arith.constant 0 : index
    %51 = vector.load %arg3[%c0_35, %c0_36] : memref<1152x128xbf16, #tpu.memory_space<vmem>>, vector<1152x128xbf16>
    %cst = arith.constant dense<0.000000e+00> : vector<128x128xf32>
    %52 = tpu.matmul %50, %51, %cst {dimension_numbers = #tpu.dot_dimension_numbers<[1], [0], [0], [1], [0, 0, 1, 1], [], []>} : vector<128x1152xbf16>, vector<1152x128xbf16>, vector<128x128xf32> -> vector<128x128xf32>
    %c0_37 = arith.constant 0 : index
    %c0_38 = arith.constant 0 : index
    %53 = vector.load %arg4[%c0_37, %c0_38] : memref<1x128xf32, #tpu.memory_space<vmem>>, vector<1x128xf32>
    %54 = vector.broadcast %53 : vector<1x128xf32> to vector<128x128xf32>
    %55 = arith.addf %52, %54 : vector<128x128xf32>
    %56 = vector.shape_cast %55 : vector<128x128xf32> to vector<1x128x128xf32>
    %57 = arith.truncf %56 : vector<1x128x128xf32> to vector<1x128x128xbf16>
    %c0_39 = arith.constant 0 : index
    %c0_40 = arith.constant 0 : index
    %c0_41 = arith.constant 0 : index
    %58 = vector.load %arg5[%c0_39, %c0_40, %c0_41] : memref<1x128x128xbf16, #tpu.memory_space<vmem>>, vector<1x128x128xbf16>
    tpu.vector_store %arg5[%c0_39, %c0_40, %c0_41], %57 {strides = array<i32>} : memref<1x128x128xbf16, #tpu.memory_space<vmem>>, vector<1x128x128xbf16>,
    return
  }
  func.func @transform_0(%arg0: i32, %arg1: i32) -> (i32, i32, i32, i32) {
    %c0_i32 = arith.constant 0 : i32
    %c0_i32_0 = arith.constant 0 : i32
    %c0_i32_1 = arith.constant 0 : i32
    %c0_i32_2 = arith.constant 0 : i32
    return %arg0, %c0_i32, %c0_i32_0, %c0_i32_1 : i32, i32, i32, i32
  }
  func.func @transform_1(%arg0: i32, %arg1: i32) -> (i32, i32) {
    %c0_i32 = arith.constant 0 : i32
    %c0_i32_0 = arith.constant 0 : i32
    %c0_i32_1 = arith.constant 0 : i32
    return %c0_i32, %c0_i32_0 : i32, i32
  }
  func.func @transform_2(%arg0: i32, %arg1: i32) -> (i32, i32) {
    %c0_i32 = arith.constant 0 : i32
    %c0_i32_0 = arith.constant 0 : i32
    %c0_i32_1 = arith.constant 0 : i32
    return %c0_i32, %c0_i32_0 : i32, i32
  }
  func.func @transform_3(%arg0: i32, %arg1: i32) -> (i32, i32, i32) {
    %c0_i32 = arith.constant 0 : i32
    %c0_i32_0 = arith.constant 0 : i32
    return %arg0, %arg1, %c0_i32 : i32, i32, i32
  }
}

</mosaic_0001>

<llo_original>
// kernel: aspp_forward.1
$region0: #{aspp_forward.1}
  #allocation0 [shape = 'u32[]', space=smem, size = 0x4, offset = 0x4, fixed_abs, tag = 'smem constant byte address 0x4 - core index']
  #allocation1 [shape = 'u32[72,128]{1,0:T(1,128)}', space=vmem, size = 0x9000, scoped, tag = 'internal scratch']
  #allocation2 [shape = 'bf16[20,20,128]{2,1,0:T(8,128)(2,1)}', space=vmem, size = 0x1e000, scoped, tag = 'scratch operand']
  #allocation3 [shape = 'bf16[128,1152]{1,0:T(8,128)(2,1)}', space=vmem, size = 0x48000, scoped, tag = 'scratch operand']
  %s0 = inlined_call_operand.vmem [shape: bf16[2,16,16,128], index: 0, kind: input, shape index: {}]
  %s1 = inlined_call_operand.vmem [shape: bf16[1152,128], index: 1, kind: input, shape index: {}]
  %s2 = inlined_call_operand.vmem [shape: f32[1,128], index: 2, kind: input, shape index: {}]
  %s3 = inlined_call_operand.vmem [shape: bf16[2,256,128], index: 3, kind: output, shape index: {}]
  %s4 = sld [smem:[#allocation0]]
  $region49: #{aspp_forward.1} parent=0
    _
  %s6 = ssub.s32 1, %s4
  %s7 = scalar_select 0, %s6, %s4
  loop: start=0, step=1, limit=6
  $region2: #{aspp_forward.1} parent=0 // loop_pre_header
    _
  $region3: #{aspp_forward.1} parent=0 // loop_header
    %s9 = sphi 0, %s13
    %p10 = scmp.ge.s32.totalorder %s9, 6
    %s16 = sphi 0, %s28
    %s17 = sphi 0, %s24
    %s18 = sphi 0, %s16
    %s19 = sphi 0, %s17
    %s20 = sphi 0, %s18
    %s21 = sphi 0, %s19
    %s31 = sphi 0, %s33
    %s34 = sphi 0, %s31
    %s35 = sphi 0, %s34
    %s51 = sphi 0, %s35
    %s55 = sphi 0, %s55
    %s57 = sphi 0, %s55
    %s58 = sphi 0, %s57
    %s72 = sphi 0, %s58
    %s76 = sphi 0, %s76
    %s78 = sphi 0, %s76
    %s79 = sphi 0, %s78
    %s93 = sphi 0, %s79
    %s101 = sphi 0, %s103
    %s104 = sphi 0, %s101
    %s105 = sphi 0, %s104
    %s121 = sphi 0, %s105
  $region4: #{aspp_forward.1} parent=0 // loop_header_branch
    %12 = sbr.rel (%p10) target = $region8
  $region5: #{aspp_forward.1} parent=0 // loop_body
    %s14 = ssub.s32 %s9, 1
    %s15 = ssub.s32 %s9, 2
    %s22 = sadd.s32 1, %s17
    %p23 = scmp.ge.s32.totalorder %s22, 2
    %s24 = scalar_select %p23, 0, %s22
    %s25 = sadd.s32 1, %s16
    %s26 = scalar_select %p23, %s25, %s16
    %p27 = scmp.ge.s32.totalorder %s26, 2
    %s28 = scalar_select %p27, 0, %s26
    %s29 = ssub.s32 %s16, %s28
    %p30 = scmp.eq.s32.totalorder %s29, 0
    %s32 = sadd.s32 %s31, 1
    %s33 = scalar_select %p30, %s31, %s32
    %p36 = pneg %p30
    %p37 = scmp.eq.s32.totalorder %s9, 3
    %p38 = por %p36, %p37
    %p39 = scmp.ne.s32.totalorder %s31, %s34
    %p40 = scmp.eq.s32.totalorder %s9, 0
    %p41 = por %p39, %p40
    %p42 = scmp.ne.s32.totalorder %s31, %s34
    %p43 = scmp.eq.s32.totalorder %s14, 3
    %p44 = por %p42, %p43
    %p45 = scmp.ne.s32.totalorder %s34, %s35
    %p46 = scmp.eq.s32.totalorder %s14, 0
    %p47 = por %p45, %p46
    %p48 = scmp.ne.s32.totalorder %s34, %s35
    %p49 = scmp.eq.s32.totalorder %s15, 3
    %p50 = por %p48, %p49
    %p52 = scmp.ne.s32.totalorder %s35, %s51
    %p53 = scmp.eq.s32.totalorder %s15, 0
    %p54 = por %p52, %p53
    %s56 = sadd.s32 %s55, 1
    %p59 = scmp.eq.s32.totalorder %s9, 3
    %p60 = scmp.ne.s32.totalorder %s55, %s57
    %p61 = scmp.eq.s32.totalorder %s9, 0
    %p62 = por %p60, %p61
    %p63 = scmp.ne.s32.totalorder %s55, %s57
    %p64 = scmp.eq.s32.totalorder %s14, 3
    %p65 = por %p63, %p64
    %p66 = scmp.ne.s32.totalorder %s57, %s58
    %p67 = scmp.eq.s32.totalorder %s14, 0
    %p68 = por %p66, %p67
    %p69 = scmp.ne.s32.totalorder %s57, %s58
    %p70 = scmp.eq.s32.totalorder %s15, 3
    %p71 = por %p69, %p70
    %p73 = scmp.ne.s32.totalorder %s58, %s72
    %p74 = scmp.eq.s32.totalorder %s15, 0
    %p75 = por %p73, %p74
    %s77 = sadd.s32 %s76, 1
    %p80 = scmp.eq.s32.totalorder %s9, 3
    %p81 = scmp.ne.s32.totalorder %s76, %s78
    %p82 = scmp.eq.s32.totalorder %s9, 0
    %p83 = por %p81, %p82
    %p84 = scmp.ne.s32.totalorder %s76, %s78
    %p85 = scmp.eq.s32.totalorder %s14, 3
    %p86 = por %p84, %p85
    %p87 = scmp.ne.s32.totalorder %s78, %s79
    %p88 = scmp.eq.s32.totalorder %s14, 0
    %p89 = por %p87, %p88
    %p90 = scmp.ne.s32.totalorder %s78, %s79
    %p91 = scmp.eq.s32.totalorder %s15, 3
    %p92 = por %p90, %p91
    %p94 = scmp.ne.s32.totalorder %s79, %s93
    %p95 = scmp.eq.s32.totalorder %s15, 0
    %p96 = por %p94, %p95
    %s97 = ssub.s32 %s16, %s28
    %s98 = ssub.s32 %s17, %s24
    %s99 = sor.u32 %s97, %s98
    %p100 = scmp.eq.s32.totalorder %s99, 0
    %s102 = sadd.s32 %s101, 1
    %s103 = scalar_select %p100, %s101, %s102
    %p106 = pneg %p100
    %p107 = scmp.eq.s32.totalorder %s9, 3
    %p108 = por %p106, %p107
    %p109 = scmp.ne.s32.totalorder %s101, %s104
    %p110 = scmp.eq.s32.totalorder %s9, 0
    %p111 = por %p109, %p110
    %p112 = scmp.ne.s32.totalorder %s101, %s104
    %p113 = scmp.eq.s32.totalorder %s14, 3
    %p114 = por %p112, %p113
    %p115 = scmp.ne.s32.totalorder %s104, %s105
    %p116 = scmp.eq.s32.totalorder %s14, 0
    %p117 = por %p115, %p116
    %p118 = scmp.ne.s32.totalorder %s104, %s105
    %p119 = scmp.eq.s32.totalorder %s15, 3
    %p120 = por %p118, %p119
    %p122 = scmp.ne.s32.totalorder %s105, %s121
    %p123 = scmp.eq.s32.totalorder %s15, 0
    %p124 = por %p122, %p123
    %p125 = scmp.le.s32.totalorder 1, %s9
    %p126 = scmp.lt.s32.totalorder %s9, 5
    %p127 = pnand %p125, %p126
    %p128 = pneg %p127
    // Predicated region
    $region9: #{aspp_forward.1} parent=5 // pred_check
      _
    $region10: #{aspp_forward.1} parent=5 // pred_check_branch
      %130 = sbr.rel (%p127) target = $region12
    $region11: #{aspp_forward.1} parent=5 // pred_region
      %s131 = ssub.s32 %s9, 1
      // Predicated region
      $region13: #{aspp_forward.1} parent=11 // pred_check
        %p132 = pneg %p68
      $region14: #{aspp_forward.1} parent=11 // pred_check_branch
        %134 = sbr.rel (%p132) target = $region16
      $region15: #{aspp_forward.1} parent=11 // pred_region
        _
      $region16: #{aspp_forward.1} parent=11 // pred_fallthru
        _
      // Predicated region
      $region17: #{aspp_forward.1} parent=11 // pred_check
        %p135 = pneg %p89
      $region18: #{aspp_forward.1} parent=11 // pred_check_branch
        %137 = sbr.rel (%p135) target = $region20
      $region19: #{aspp_forward.1} parent=11 // pred_region
        _
      $region20: #{aspp_forward.1} parent=11 // pred_fallthru
        _
    $region12: #{aspp_forward.1} parent=5 // pred_fallthru
      _
    %p138 = scmp.lt.s32.totalorder %s9, 4
    // Predicated region
    $region21: #{aspp_forward.1} parent=5 // pred_check
      %p139 = pneg %p138
    $region22: #{aspp_forward.1} parent=5 // pred_check_branch
      %141 = sbr.rel (%p139) target = $region24
    $region23: #{aspp_forward.1} parent=5 // pred_region
      // Predicated region
      $region25: #{aspp_forward.1} parent=23 // pred_check
        %p142 = pneg %p41
      $region26: #{aspp_forward.1} parent=23 // pred_check_branch
        %144 = sbr.rel (%p142) target = $region28
      $region27: #{aspp_forward.1} parent=23 // pred_region
        %p145 = scmp.lt.s32.totalorder %s16, 1
        %s146 = scalar_select %p145, %s16, 1
        %s147 = smul.addr %s146, 32
        %s148 = smul.addr %s147, 4
        %s149 = scalar_lea.vmem %s0, %s148
      $region28: #{aspp_forward.1} parent=23 // pred_fallthru
        _
    $region24: #{aspp_forward.1} parent=5 // pred_fallthru
      _
    %p150 = scmp.le.s32.totalorder 1, %s9
    %p151 = scmp.lt.s32.totalorder %s9, 5
    %p152 = pnand %p150, %p151
    %p153 = pneg %p152
    // Predicated region
    $region29: #{aspp_forward.1} parent=5 // pred_check
      _
    $region30: #{aspp_forward.1} parent=5 // pred_check_branch
      %155 = sbr.rel (%p152) target = $region32
    $region31: #{aspp_forward.1} parent=5 // pred_region
      %s156 = ssub.s32 %s9, 1
      %p157 = scmp.lt.s32.totalorder %s18, 1
      %s158 = scalar_select %p157, %s18, 1
      %s159 = smul.addr %s158, 32
      %s160 = smul.addr %s159, 4
      %s161 = scalar_lea.vmem %s0, %s160
      %p162 = pneg %p47
      %p163 = pneg %p44
      %p164 = pneg %p68
      %p165 = pneg %p65
      %p166 = pneg %p89
      %p167 = pneg %p86
      %p168 = pneg %p117
      %p169 = pneg %p114
      %s170 = smul.u32 16, %s19
      %p171 = scmp.lt.s32.totalorder %s18, 1
      %s172 = scalar_select %p171, %s18, 1
      %p173 = scmp.lt.s32.totalorder %s170, 31
      %s174 = scalar_select %p173, %s170, 31
      %s175 = smul.addr %s172, 32
      %s176 = sadd.s32 %s174, %s175
      %s177 = smul.addr %s176, 4
      %s178 = scalar_lea.vmem %s3, %s177
      %p179 = scmp.lt.s32.totalorder %s18, 1
      %s180 = scalar_select %p179, %s18, 1
      %s181 = smul.addr %s180, 32
      %s182 = smul.addr %s181, 4
      %s183 = scalar_lea.vmem %s0, %s182
      %s184 = smul.u32 16, %s19
      %p185 = scmp.lt.s32.totalorder %s18, 1
      %s186 = scalar_select %p185, %s18, 1
      %p187 = scmp.lt.s32.totalorder %s184, 31
      %s188 = scalar_select %p187, %s184, 31
      %s189 = smul.addr %s186, 32
      %s190 = sadd.s32 %s188, %s189
      %s191 = smul.addr %s190, 4
      %s192 = scalar_lea.vmem %s3, %s191
      %s193 = smul.u32 16, %s19
      %p195 = scmp.eq.s32.totalorder %s19, 0
      // Predicated region
      $region33: #{aspp_forward.1} parent=31 // pred_check
        %p196 = pneg %p195
      $region34: #{aspp_forward.1} parent=31 // pred_check_branch
        %198 = sbr.rel (%p196) target = $region36
      $region35: #{aspp_forward.1} parent=31 // pred_region
        %199 = vst [vmem:[#allocation2] sm:$0xf] 0
        %200 = vst [vmem:[#allocation2 + $0x4] sm:$0xf] 0
        %201 = vst [vmem:[#allocation2 + $0x8] sm:$0x3] 0
        %202 = vst [vmem:[#allocation2 + $0xc] sm:$0xf] 0
        %203 = vst [vmem:[#allocation2 + $0x10] sm:$0xf] 0
        %204 = vst [vmem:[#allocation2 + $0x14] sm:$0x3] 0
        %205 = vst [vmem:[#allocation2 + $0x18] sm:$0xf] 0
        %206 = vst [vmem:[#allocation2 + $0x1c] sm:$0xf] 0
        %207 = vst [vmem:[#allocation2 + $0x20] sm:$0x3] 0
        %208 = vst [vmem:[#allocation2 + $0x24] sm:$0xf] 0
        %209 = vst [vmem:[#allocation2 + $0x28] sm:$0xf] 0
        %210 = vst [vmem:[#allocation2 + $0x2c] sm:$0x3] 0
        %211 = vst [vmem:[#allocation2 + $0x30] sm:$0xf] 0
        %212 = vst [vmem:[#allocation2 + $0x34] sm:$0xf] 0
        %213 = vst [vmem:[#allocation2 + $0x38] sm:$0x3] 0
        %214 = vst [vmem:[#allocation2 + $0x3c] sm:$0xf] 0
        %215 = vst [vmem:[#allocation2 + $0x40] sm:$0xf] 0
        %216 = vst [vmem:[#allocation2 + $0x44] sm:$0x3] 0
        %217 = vst [vmem:[#allocation2 + $0x48] sm:$0xf] 0
        %218 = vst [vmem:[#allocation2 + $0x4c] sm:$0xf] 0
        %219 = vst [vmem:[#allocation2 + $0x50] sm:$0x3] 0
        %220 = vst [vmem:[#allocation2 + $0x54] sm:$0xf] 0
        %221 = vst [vmem:[#allocation2 + $0x58] sm:$0xf] 0
        %222 = vst [vmem:[#allocation2 + $0x5c] sm:$0x3] 0
        %223 = vst [vmem:[#allocation2 + $0x60] sm:$0xf] 0
        %224 = vst [vmem:[#allocation2 + $0x64] sm:$0xf] 0
        %225 = vst [vmem:[#allocation2 + $0x68] sm:$0x3] 0
        %226 = vst [vmem:[#allocation2 + $0x6c] sm:$0xf] 0
        %227 = vst [vmem:[#allocation2 + $0x70] sm:$0xf] 0
        %228 = vst [vmem:[#allocation2 + $0x74] sm:$0x3] 0
        %229 = vst [vmem:[#allocation2 + $0x78] sm:$0xf] 0
        %230 = vst [vmem:[#allocation2 + $0x7c] sm:$0xf] 0
        %231 = vst [vmem:[#allocation2 + $0x80] sm:$0x3] 0
        %232 = vst [vmem:[#allocation2 + $0x84] sm:$0xf] 0
        %233 = vst [vmem:[#allocation2 + $0x88] sm:$0xf] 0
        %234 = vst [vmem:[#allocation2 + $0x8c] sm:$0x3] 0
        %235 = vst [vmem:[#allocation2 + $0x90] sm:$0xf] 0
        %236 = vst [vmem:[#allocation2 + $0x94] sm:$0xf] 0
        %237 = vst [vmem:[#allocation2 + $0x98] sm:$0x3] 0
        %238 = vst [vmem:[#allocation2 + $0x9c] sm:$0xf] 0
        %239 = vst [vmem:[#allocation2 + $0xa0] sm:$0xf] 0
        %240 = vst [vmem:[#allocation2 + $0xa4] sm:$0x3] 0
        %241 = vst [vmem:[#allocation2 + $0xa8] sm:$0xf] 0
        %242 = vst [vmem:[#allocation2 + $0xac] sm:$0xf] 0
        %243 = vst [vmem:[#allocation2 + $0xb0] sm:$0x3] 0
        %244 = vst [vmem:[#allocation2 + $0xb4] sm:$0xf] 0
        %245 = vst [vmem:[#allocation2 + $0xb8] sm:$0xf] 0
        %246 = vst [vmem:[#allocation2 + $0xbc] sm:$0x3] 0
        %247 = vst [vmem:[#allocation2 + $0xc0] sm:$0xf] 0
        %248 = vst [vmem:[#allocation2 + $0xc4] sm:$0xf] 0
        %249 = vst [vmem:[#allocation2 + $0xc8] sm:$0x3] 0
        %250 = vst [vmem:[#allocation2 + $0xcc] sm:$0xf] 0
        %251 = vst [vmem:[#allocation2 + $0xd0] sm:$0xf] 0
        %252 = vst [vmem:[#allocation2 + $0xd4] sm:$0x3] 0
        %253 = vst [vmem:[#allocation2 + $0xd8] sm:$0xf] 0
        %254 = vst [vmem:[#allocation2 + $0xdc] sm:$0xf] 0
        %255 = vst [vmem:[#allocation2 + $0xe0] sm:$0x3] 0
        %256 = vst [vmem:[#allocation2 + $0xe4] sm:$0xf] 0
        %257 = vst [vmem:[#allocation2 + $0xe8] sm:$0xf] 0
        %258 = vst [vmem:[#allocation2 + $0xec] sm:$0x3] 0
        %v259 = vld [vmem:[%s183] sm:$0xf]
        %v260 = vld [vmem:[%s183 + $0x4] sm:$0xf]
        %v261 = vld [vmem:[%s183 + $0x8] sm:$0xf]
        %v262 = vld [vmem:[%s183 + $0xc] sm:$0xf]
        %v263 = vld [vmem:[%s183 + $0x10] sm:$0xf]
        %v264 = vld [vmem:[%s183 + $0x14] sm:$0xf]
        %v265 = vld [vmem:[%s183 + $0x18] sm:$0xf]
        %v266 = vld [vmem:[%s183 + $0x1c] sm:$0xf]
        %v267 = vld [vmem:[%s183 + $0x20] sm:$0xf]
        %v268 = vld [vmem:[%s183 + $0x24] sm:$0xf]
        %v269 = vld [vmem:[%s183 + $0x28] sm:$0xf]
        %v270 = vld [vmem:[%s183 + $0x2c] sm:$0xf]
        %v271 = vld [vmem:[%s183 + $0x30] sm:$0xf]
        %v272 = vld [vmem:[%s183 + $0x34] sm:$0xf]
        %v273 = vld [vmem:[%s183 + $0x38] sm:$0xf]
        %v274 = vld [vmem:[%s183 + $0x3c] sm:$0xf]
        %v275 = vld [vmem:[%s183 + $0x40] sm:$0xf]
        %v276 = vld [vmem:[%s183 + $0x44] sm:$0xf]
        %v277 = vld [vmem:[%s183 + $0x48] sm:$0xf]
        %v278 = vld [vmem:[%s183 + $0x4c] sm:$0xf]
        %v279 = vld [vmem:[%s183 + $0x50] sm:$0xf]
        %v280 = vld [vmem:[%s183 + $0x54] sm:$0xf]
        %v281 = vld [vmem:[%s183 + $0x58] sm:$0xf]
        %v282 = vld [vmem:[%s183 + $0x5c] sm:$0xf]
        %v283 = vld [vmem:[%s183 + $0x60] sm:$0xf]
        %v284 = vld [vmem:[%s183 + $0x64] sm:$0xf]
        %v285 = vld [vmem:[%s183 + $0x68] sm:$0xf]
        %v286 = vld [vmem:[%s183 + $0x6c] sm:$0xf]
        %v287 = vld [vmem:[%s183 + $0x70] sm:$0xf]
        %v288 = vld [vmem:[%s183 + $0x74] sm:$0xf]
        %v289 = vld [vmem:[%s183 + $0x78] sm:$0xf]
        %v290 = vld [vmem:[%s183 + $0x7c] sm:$0xf]
        %vm323 = vcmask 1040384
        %vm324 = vcmask 1044484
        %vm325 = vmor %vm323, %vm324
        %v326 = vrot.slane %v259, 7
        %v327 = vrot.slane %v326, 4
        %v328 = vrot.slane %v260, 7
        %v329 = vsel %vm325, %v327, %v328
        %v330 = vrot.slane %v328, 4
        %v331 = vrot.slane %v261, 7
        %v332 = vrot.slane %v331, 4
        %v333 = vrot.slane %v262, 7
        %v334 = vsel %vm325, %v332, %v333
        %v335 = vrot.slane %v333, 4
        %v336 = vrot.slane %v263, 7
        %v337 = vrot.slane %v336, 4
        %v338 = vrot.slane %v264, 7
        %v339 = vsel %vm325, %v337, %v338
        %v340 = vrot.slane %v338, 4
        %v341 = vrot.slane %v265, 7
        %v342 = vrot.slane %v341, 4
        %v343 = vrot.slane %v266, 7
        %v344 = vsel %vm325, %v342, %v343
        %v345 = vrot.slane %v343, 4
        %v346 = vrot.slane %v267, 7
        %v347 = vrot.slane %v346, 4
        %v348 = vrot.slane %v268, 7
        %v349 = vsel %vm325, %v347, %v348
        %v350 = vrot.slane %v348, 4
        %v351 = vrot.slane %v269, 7
        %v352 = vrot.slane %v351, 4
        %v353 = vrot.slane %v270, 7
        %v354 = vsel %vm325, %v352, %v353
        %v355 = vrot.slane %v353, 4
        %v356 = vrot.slane %v271, 7
        %v357 = vrot.slane %v356, 4
        %v358 = vrot.slane %v272, 7
        %v359 = vsel %vm325, %v357, %v358
        %v360 = vrot.slane %v358, 4
        %v361 = vrot.slane %v273, 7
        %v362 = vrot.slane %v361, 4
        %v363 = vrot.slane %v274, 7
        %v364 = vsel %vm325, %v362, %v363
        %v365 = vrot.slane %v363, 4
        %v366 = vrot.slane %v275, 7
        %v367 = vrot.slane %v366, 4
        %v368 = vrot.slane %v276, 7
        %v369 = vsel %vm325, %v367, %v368
        %v370 = vrot.slane %v368, 4
        %v371 = vrot.slane %v277, 7
        %v372 = vrot.slane %v371, 4
        %v373 = vrot.slane %v278, 7
        %v374 = vsel %vm325, %v372, %v373
        %v375 = vrot.slane %v373, 4
        %v376 = vrot.slane %v279, 7
        %v377 = vrot.slane %v376, 4
        %v378 = vrot.slane %v280, 7
        %v379 = vsel %vm325, %v377, %v378
        %v380 = vrot.slane %v378, 4
        %v381 = vrot.slane %v281, 7
        %v382 = vrot.slane %v381, 4
        %v383 = vrot.slane %v282, 7
        %v384 = vsel %vm325, %v382, %v383
        %v385 = vrot.slane %v383, 4
        %v386 = vrot.slane %v283, 7
        %v387 = vrot.slane %v386, 4
        %v388 = vrot.slane %v284, 7
        %v389 = vsel %vm325, %v387, %v388
        %v390 = vrot.slane %v388, 4
        %v391 = vrot.slane %v285, 7
        %v392 = vrot.slane %v391, 4
        %v393 = vrot.slane %v286, 7
        %v394 = vsel %vm325, %v392, %v393
        %v395 = vrot.slane %v393, 4
        %v396 = vrot.slane %v287, 7
        %v397 = vrot.slane %v396, 4
        %v398 = vrot.slane %v288, 7
        %v399 = vsel %vm325, %v397, %v398
        %v400 = vrot.slane %v398, 4
        %v401 = vrot.slane %v289, 7
        %v402 = vrot.slane %v401, 4
        %v403 = vrot.slane %v290, 7
        %v404 = vsel %vm325, %v402, %v403
        %v405 = vrot.slane %v403, 4
        %s454 = scalar_lea.vmem [#allocation2], 24
        %455 = vst [vmem:[%s454] sm:$0xe] %v326
        %456 = vst [vmem:[%s454 + $0x4] sm:$0xf] %v329
        %457 = vst [vmem:[%s454 + $0x8] sm:$0x1] %v330
        %458 = vst [vmem:[%s454 + $0xc] sm:$0xe] %v331
        %459 = vst [vmem:[%s454 + $0x10] sm:$0xf] %v334
        %460 = vst [vmem:[%s454 + $0x14] sm:$0x1] %v335
        %461 = vst [vmem:[%s454 + $0x18] sm:$0xe] %v336
        %462 = vst [vmem:[%s454 + $0x1c] sm:$0xf] %v339
        %463 = vst [vmem:[%s454 + $0x20] sm:$0x1] %v340
        %464 = vst [vmem:[%s454 + $0x24] sm:$0xe] %v341
        %465 = vst [vmem:[%s454 + $0x28] sm:$0xf] %v344
        %466 = vst [vmem:[%s454 + $0x2c] sm:$0x1] %v345
        %467 = vst [vmem:[%s454 + $0x30] sm:$0xe] %v346
        %468 = vst [vmem:[%s454 + $0x34] sm:$0xf] %v349
        %469 = vst [vmem:[%s454 + $0x38] sm:$0x1] %v350
        %470 = vst [vmem:[%s454 + $0x3c] sm:$0xe] %v351
        %471 = vst [vmem:[%s454 + $0x40] sm:$0xf] %v354
        %472 = vst [vmem:[%s454 + $0x44] sm:$0x1] %v355
        %473 = vst [vmem:[%s454 + $0x48] sm:$0xe] %v356
        %474 = vst [vmem:[%s454 + $0x4c] sm:$0xf] %v359
        %475 = vst [vmem:[%s454 + $0x50] sm:$0x1] %v360
        %476 = vst [vmem:[%s454 + $0x54] sm:$0xe] %v361
        %477 = vst [vmem:[%s454 + $0x58] sm:$0xf] %v364
        %478 = vst [vmem:[%s454 + $0x5c] sm:$0x1] %v365
        %479 = vst [vmem:[%s454 + $0x60] sm:$0xe] %v366
        %480 = vst [vmem:[%s454 + $0x64] sm:$0xf] %v369
        %481 = vst [vmem:[%s454 + $0x68] sm:$0x1] %v370
        %482 = vst [vmem:[%s454 + $0x6c] sm:$0xe] %v371
        %483 = vst [vmem:[%s454 + $0x70] sm:$0xf] %v374
        %484 = vst [vmem:[%s454 + $0x74] sm:$0x1] %v375
        %485 = vst [vmem:[%s454 + $0x78] sm:$0xe] %v376
        %486 = vst [vmem:[%s454 + $0x7c] sm:$0xf] %v379
        %487 = vst [vmem:[%s454 + $0x80] sm:$0x1] %v380
        %488 = vst [vmem:[%s454 + $0x84] sm:$0xe] %v381
        %489 = vst [vmem:[%s454 + $0x88] sm:$0xf] %v384
        %490 = vst [vmem:[%s454 + $0x8c] sm:$0x1] %v385
        %491 = vst [vmem:[%s454 + $0x90] sm:$0xe] %v386
        %492 = vst [vmem:[%s454 + $0x94] sm:$0xf] %v389
        %493 = vst [vmem:[%s454 + $0x98] sm:$0x1] %v390
        %494 = vst [vmem:[%s454 + $0x9c] sm:$0xe] %v391
        %495 = vst [vmem:[%s454 + $0xa0] sm:$0xf] %v394
        %496 = vst [vmem:[%s454 + $0xa4] sm:$0x1] %v395
        %497 = vst [vmem:[%s454 + $0xa8] sm:$0xe] %v396
        %498 = vst [vmem:[%s454 + $0xac] sm:$0xf] %v399
        %499 = vst [vmem:[%s454 + $0xb0] sm:$0x1] %v400
        %500 = vst [vmem:[%s454 + $0xb4] sm:$0xe] %v401
        %501 = vst [vmem:[%s454 + $0xb8] sm:$0xf] %v404
        %502 = vst [vmem:[%s454 + $0xbc] sm:$0x1] %v405
      $region36: #{aspp_forward.1} parent=31 // pred_fallthru
        _
      %s503 = smul.u32 %s19, 8
      %s504 = smul.u32 %s503, 3
      %s505 = smul.addr %s504, 4
      %s506 = scalar_lea.vmem [#allocation2], %s505
      %v507 = vld [vmem:[%s506] sm:$0xf]
      %v508 = vld [vmem:[%s506 + $0x4] sm:$0xf]
      %v509 = vld [vmem:[%s506 + $0xc] sm:$0xf]
      %v510 = vld [vmem:[%s506 + $0x10] sm:$0xf]
      %v511 = vld [vmem:[%s506 + $0x18] sm:$0xf]
      %v512 = vld [vmem:[%s506 + $0x1c] sm:$0xf]
      %v513 = vld [vmem:[%s506 + $0x24] sm:$0xf]
      %v514 = vld [vmem:[%s506 + $0x28] sm:$0xf]
      %v515 = vld [vmem:[%s506 + $0x30] sm:$0xf]
      %v516 = vld [vmem:[%s506 + $0x34] sm:$0xf]
      %v517 = vld [vmem:[%s506 + $0x3c] sm:$0xf]
      %v518 = vld [vmem:[%s506 + $0x40] sm:$0xf]
      %v519 = vld [vmem:[%s506 + $0x48] sm:$0xf]
      %v520 = vld [vmem:[%s506 + $0x4c] sm:$0xf]
      %v521 = vld [vmem:[%s506 + $0x54] sm:$0xf]
      %v522 = vld [vmem:[%s506 + $0x58] sm:$0xf]
      %523 = vst [vmem:[#allocation3] sm:$0xf] %v507
      %524 = vst [vmem:[#allocation3 + $0x24] sm:$0xf] %v508
      %525 = vst [vmem:[#allocation3 + $0x48] sm:$0xf] %v509
      %526 = vst [vmem:[#allocation3 + $0x6c] sm:$0xf] %v510
      %527 = vst [vmem:[#allocation3 + $0x90] sm:$0xf] %v511
      %528 = vst [vmem:[#allocation3 + $0xb4] sm:$0xf] %v512
      %529 = vst [vmem:[#allocation3 + $0xd8] sm:$0xf] %v513
      %530 = vst [vmem:[#allocation3 + $0xfc] sm:$0xf] %v514
      %531 = vst [vmem:[#allocation3 + $0x120] sm:$0xf] %v515
      %532 = vst [vmem:[#allocation3 + $0x144] sm:$0xf] %v516
      %533 = vst [vmem:[#allocation3 + $0x168] sm:$0xf] %v517
      %534 = vst [vmem:[#allocation3 + $0x18c] sm:$0xf] %v518
      %535 = vst [vmem:[#allocation3 + $0x1b0] sm:$0xf] %v519
      %536 = vst [vmem:[#allocation3 + $0x1d4] sm:$0xf] %v520
      %537 = vst [vmem:[#allocation3 + $0x1f8] sm:$0xf] %v521
      %538 = vst [vmem:[#allocation3 + $0x21c] sm:$0xf] %v522
      %v539 = vld [vmem:[%s506] sm:$0xe]
      %v540 = vld [vmem:[%s506 + $0x4] sm:$0xf]
      %v541 = vld [vmem:[%s506 + $0x8] sm:$0x1]
      %v542 = vld [vmem:[%s506 + $0xc] sm:$0xe]
      %v543 = vld [vmem:[%s506 + $0x10] sm:$0xf]
      %v544 = vld [vmem:[%s506 + $0x14] sm:$0x1]
      %v545 = vld [vmem:[%s506 + $0x18] sm:$0xe]
      %v546 = vld [vmem:[%s506 + $0x1c] sm:$0xf]
      %v547 = vld [vmem:[%s506 + $0x20] sm:$0x1]
      %v548 = vld [vmem:[%s506 + $0x24] sm:$0xe]
      %v549 = vld [vmem:[%s506 + $0x28] sm:$0xf]
      %v550 = vld [vmem:[%s506 + $0x2c] sm:$0x1]
      %v551 = vld [vmem:[%s506 + $0x30] sm:$0xe]
      %v552 = vld [vmem:[%s506 + $0x34] sm:$0xf]
      %v553 = vld [vmem:[%s506 + $0x38] sm:$0x1]
      %v554 = vld [vmem:[%s506 + $0x3c] sm:$0xe]
      %v555 = vld [vmem:[%s506 + $0x40] sm:$0xf]
      %v556 = vld [vmem:[%s506 + $0x44] sm:$0x1]
      %v557 = vld [vmem:[%s506 + $0x48] sm:$0xe]
      %v558 = vld [vmem:[%s506 + $0x4c] sm:$0xf]
      %v559 = vld [vmem:[%s506 + $0x50] sm:$0x1]
      %v560 = vld [vmem:[%s506 + $0x54] sm:$0xe]
      %v561 = vld [vmem:[%s506 + $0x58] sm:$0xf]
      %v562 = vld [vmem:[%s506 + $0x5c] sm:$0x1]
      %vm587 = vcmask 1042432
      %vm588 = vcmask 1046532
      %vm589 = vmor %vm587, %vm588
      %v590 = vrot.slane %v539, 5
      %v591 = vrot.slane %v590, 4
      %v592 = vrot.slane %v540, 5
      %v593 = vsel %vm589, %v591, %v592
      %v594 = vrot.slane %v592, 4
      %v595 = vrot.slane %v541, 5
      %v596 = vsel %vm589, %v594, %v595
      %v597 = vrot.slane %v542, 5
      %v598 = vrot.slane %v597, 4
      %v599 = vrot.slane %v543, 5
      %v600 = vsel %vm589, %v598, %v599
      %v601 = vrot.slane %v599, 4
      %v602 = vrot.slane %v544, 5
      %v603 = vsel %vm589, %v601, %v602
      %v604 = vrot.slane %v545, 5
      %v605 = vrot.slane %v604, 4
      %v606 = vrot.slane %v546, 5
      %v607 = vsel %vm589, %v605, %v606
      %v608 = vrot.slane %v606, 4
      %v609 = vrot.slane %v547, 5
      %v610 = vsel %vm589, %v608, %v609
      %v611 = vrot.slane %v548, 5
      %v612 = vrot.slane %v611, 4
      %v613 = vrot.slane %v549, 5
      %v614 = vsel %vm589, %v612, %v613
      %v615 = vrot.slane %v613, 4
      %v616 = vrot.slane %v550, 5
      %v617 = vsel %vm589, %v615, %v616
      %v618 = vrot.slane %v551, 5
      %v619 = vrot.slane %v618, 4
      %v620 = vrot.slane %v552, 5
      %v621 = vsel %vm589, %v619, %v620
      %v622 = vrot.slane %v620, 4
      %v623 = vrot.slane %v553, 5
      %v624 = vsel %vm589, %v622, %v623
      %v625 = vrot.slane %v554, 5
      %v626 = vrot.slane %v625, 4
      %v627 = vrot.slane %v555, 5
      %v628 = vsel %vm589, %v626, %v627
      %v629 = vrot.slane %v627, 4
      %v630 = vrot.slane %v556, 5
      %v631 = vsel %vm589, %v629, %v630
      %v632 = vrot.slane %v557, 5
      %v633 = vrot.slane %v632, 4
      %v634 = vrot.slane %v558, 5
      %v635 = vsel %vm589, %v633, %v634
      %v636 = vrot.slane %v634, 4
      %v637 = vrot.slane %v559, 5
      %v638 = vsel %vm589, %v636, %v637
      %v639 = vrot.slane %v560, 5
      %v640 = vrot.slane %v639, 4
      %v641 = vrot.slane %v561, 5
      %v642 = vsel %vm589, %v640, %v641
      %v643 = vrot.slane %v641, 4
      %v644 = vrot.slane %v562, 5
      %v645 = vsel %vm589, %v643, %v644
      %662 = vst [vmem:[#allocation3 + $0x4] sm:$0xf] %v593
      %663 = vst [vmem:[#allocation3 + $0x28] sm:$0xf] %v596
      %664 = vst [vmem:[#allocation3 + $0x4c] sm:$0xf] %v600
      %665 = vst [vmem:[#allocation3 + $0x70] sm:$0xf] %v603
      %666 = vst [vmem:[#allocation3 + $0x94] sm:$0xf] %v607
      %667 = vst [vmem:[#allocation3 + $0xb8] sm:$0xf] %v610
      %668 = vst [vmem:[#allocation3 + $0xdc] sm:$0xf] %v614
      %669 = vst [vmem:[#allocation3 + $0x100] sm:$0xf] %v617
      %670 = vst [vmem:[#allocation3 + $0x124] sm:$0xf] %v621
      %671 = vst [vmem:[#allocation3 + $0x148] sm:$0xf] %v624
      %672 = vst [vmem:[#allocation3 + $0x16c] sm:$0xf] %v628
      %673 = vst [vmem:[#allocation3 + $0x190] sm:$0xf] %v631
      %674 = vst [vmem:[#allocation3 + $0x1b4] sm:$0xf] %v635
      %675 = vst [vmem:[#allocation3 + $0x1d8] sm:$0xf] %v638
      %676 = vst [vmem:[#allocation3 + $0x1fc] sm:$0xf] %v642
      %677 = vst [vmem:[#allocation3 + $0x220] sm:$0xf] %v645
      %v678 = vld [vmem:[%s506] sm:$0xc]
      %v679 = vld [vmem:[%s506 + $0x4] sm:$0xf]
      %v680 = vld [vmem:[%s506 + $0x8] sm:$0x3]
      %v681 = vld [vmem:[%s506 + $0xc] sm:$0xc]
      %v682 = vld [vmem:[%s506 + $0x10] sm:$0xf]
      %v683 = vld [vmem:[%s506 + $0x14] sm:$0x3]
      %v684 = vld [vmem:[%s506 + $0x18] sm:$0xc]
      %v685 = vld [vmem:[%s506 + $0x1c] sm:$0xf]
      %v686 = vld [vmem:[%s506 + $0x20] sm:$0x3]
      %v687 = vld [vmem:[%s506 + $0x24] sm:$0xc]
      %v688 = vld [vmem:[%s506 + $0x28] sm:$0xf]
      %v689 = vld [vmem:[%s506 + $0x2c] sm:$0x3]
      %v690 = vld [vmem:[%s506 + $0x30] sm:$0xc]
      %v691 = vld [vmem:[%s506 + $0x34] sm:$0xf]
      %v692 = vld [vmem:[%s506 + $0x38] sm:$0x3]
      %v693 = vld [vmem:[%s506 + $0x3c] sm:$0xc]
      %v694 = vld [vmem:[%s506 + $0x40] sm:$0xf]
      %v695 = vld [vmem:[%s506 + $0x44] sm:$0x3]
      %v696 = vld [vmem:[%s506 + $0x48] sm:$0xc]
      %v697 = vld [vmem:[%s506 + $0x4c] sm:$0xf]
      %v698 = vld [vmem:[%s506 + $0x50] sm:$0x3]
      %v699 = vld [vmem:[%s506 + $0x54] sm:$0xc]
      %v700 = vld [vmem:[%s506 + $0x58] sm:$0xf]
      %v701 = vld [vmem:[%s506 + $0x5c] sm:$0x3]
      %vm726 = vcmask 1041408
      %vm727 = vcmask 1045508
      %vm728 = vmor %vm726, %vm727
      %v729 = vrot.slane %v678, 6
      %v730 = vrot.slane %v729, 4
      %v731 = vrot.slane %v679, 6
      %v732 = vsel %vm728, %v730, %v731
      %v733 = vrot.slane %v731, 4
      %v734 = vrot.slane %v680, 6
      %v735 = vsel %vm728, %v733, %v734
      %v736 = vrot.slane %v681, 6
      %v737 = vrot.slane %v736, 4
      %v738 = vrot.slane %v682, 6
      %v739 = vsel %vm728, %v737, %v738
      %v740 = vrot.slane %v738, 4
      %v741 = vrot.slane %v683, 6
      %v742 = vsel %vm728, %v740, %v741
      %v743 = vrot.slane %v684, 6
      %v744 = vrot.slane %v743, 4
      %v745 = vrot.slane %v685, 6
      %v746 = vsel %vm728, %v744, %v745
      %v747 = vrot.slane %v745, 4
      %v748 = vrot.slane %v686, 6
      %v749 = vsel %vm728, %v747, %v748
      %v750 = vrot.slane %v687, 6
      %v751 = vrot.slane %v750, 4
      %v752 = vrot.slane %v688, 6
      %v753 = vsel %vm728, %v751, %v752
      %v754 = vrot.slane %v752, 4
      %v755 = vrot.slane %v689, 6
      %v756 = vsel %vm728, %v754, %v755
      %v757 = vrot.slane %v690, 6
      %v758 = vrot.slane %v757, 4
      %v759 = vrot.slane %v691, 6
      %v760 = vsel %vm728, %v758, %v759
      %v761 = vrot.slane %v759, 4
      %v762 = vrot.slane %v692, 6
      %v763 = vsel %vm728, %v761, %v762
      %v764 = vrot.slane %v693, 6
      %v765 = vrot.slane %v764, 4
      %v766 = vrot.slane %v694, 6
      %v767 = vsel %vm728, %v765, %v766
      %v768 = vrot.slane %v766, 4
      %v769 = vrot.slane %v695, 6
      %v770 = vsel %vm728, %v768, %v769
      %v771 = vrot.slane %v696, 6
      %v772 = vrot.slane %v771, 4
      %v773 = vrot.slane %v697, 6
      %v774 = vsel %vm728, %v772, %v773
      %v775 = vrot.slane %v773, 4
      %v776 = vrot.slane %v698, 6
      %v777 = vsel %vm728, %v775, %v776
      %v778 = vrot.slane %v699, 6
      %v779 = vrot.slane %v778, 4
      %v780 = vrot.slane %v700, 6
      %v781 = vsel %vm728, %v779, %v780
      %v782 = vrot.slane %v780, 4
      %v783 = vrot.slane %v701, 6
      %v784 = vsel %vm728, %v782, %v783
      %801 = vst [vmem:[#allocation3 + $0x8] sm:$0xf] %v732
      %802 = vst [vmem:[#allocation3 + $0x2c] sm:$0xf] %v735
      %803 = vst [vmem:[#allocation3 + $0x50] sm:$0xf] %v739
      %804 = vst [vmem:[#allocation3 + $0x74] sm:$0xf] %v742
      %805 = vst [vmem:[#allocation3 + $0x98] sm:$0xf] %v746
      %806 = vst [vmem:[#allocation3 + $0xbc] sm:$0xf] %v749
      %807 = vst [vmem:[#allocation3 + $0xe0] sm:$0xf] %v753
      %808 = vst [vmem:[#allocation3 + $0x104] sm:$0xf] %v756
      %809 = vst [vmem:[#allocation3 + $0x128] sm:$0xf] %v760
      %810 = vst [vmem:[#allocation3 + $0x14c] sm:$0xf] %v763
      %811 = vst [vmem:[#allocation3 + $0x170] sm:$0xf] %v767
      %812 = vst [vmem:[#allocation3 + $0x194] sm:$0xf] %v770
      %813 = vst [vmem:[#allocation3 + $0x1b8] sm:$0xf] %v774
      %814 = vst [vmem:[#allocation3 + $0x1dc] sm:$0xf] %v777
      %815 = vst [vmem:[#allocation3 + $0x200] sm:$0xf] %v781
      %816 = vst [vmem:[#allocation3 + $0x224] sm:$0xf] %v784
      %s817 = sadd.s32 %s503, 2
      %s818 = smul.u32 %s817, 3
      %s819 = smul.addr %s818, 4
      %s820 = scalar_lea.vmem [#allocation2], %s819
      %v821 = vld [vmem:[%s820] sm:$0xf]
      %v822 = vld [vmem:[%s820 + $0x4] sm:$0xf]
      %v823 = vld [vmem:[%s820 + $0xc] sm:$0xf]
      %v824 = vld [vmem:[%s820 + $0x10] sm:$0xf]
      %v825 = vld [vmem:[%s820 + $0x18] sm:$0xf]
      %v826 = vld [vmem:[%s820 + $0x1c] sm:$0xf]
      %v827 = vld [vmem:[%s820 + $0x24] sm:$0xf]
      %v828 = vld [vmem:[%s820 + $0x28] sm:$0xf]
      %v829 = vld [vmem:[%s820 + $0x30] sm:$0xf]
      %v830 = vld [vmem:[%s820 + $0x34] sm:$0xf]
      %v831 = vld [vmem:[%s820 + $0x3c] sm:$0xf]
      %v832 = vld [vmem:[%s820 + $0x40] sm:$0xf]
      %v833 = vld [vmem:[%s820 + $0x48] sm:$0xf]
      %v834 = vld [vmem:[%s820 + $0x4c] sm:$0xf]
      %v835 = vld [vmem:[%s820 + $0x54] sm:$0xf]
      %v836 = vld [vmem:[%s820 + $0x58] sm:$0xf]
      %837 = vst [vmem:[#allocation3 + $0xc] sm:$0xf] %v821
      %838 = vst [vmem:[#allocation3 + $0x30] sm:$0xf] %v822
      %839 = vst [vmem:[#allocation3 + $0x54] sm:$0xf] %v823
      %840 = vst [vmem:[#allocation3 + $0x78] sm:$0xf] %v824
      %841 = vst [vmem:[#allocation3 + $0x9c] sm:$0xf] %v825
      %842 = vst [vmem:[#allocation3 + $0xc0] sm:$0xf] %v826
      %843 = vst [vmem:[#allocation3 + $0xe4] sm:$0xf] %v827
      %844 = vst [vmem:[#allocation3 + $0x108] sm:$0xf] %v828
      %845 = vst [vmem:[#allocation3 + $0x12c] sm:$0xf] %v829
      %846 = vst [vmem:[#allocation3 + $0x150] sm:$0xf] %v830
      %847 = vst [vmem:[#allocation3 + $0x174] sm:$0xf] %v831
      %848 = vst [vmem:[#allocation3 + $0x198] sm:$0xf] %v832
      %849 = vst [vmem:[#allocation3 + $0x1bc] sm:$0xf] %v833
      %850 = vst [vmem:[#allocation3 + $0x1e0] sm:$0xf] %v834
      %851 = vst [vmem:[#allocation3 + $0x204] sm:$0xf] %v835
      %852 = vst [vmem:[#allocation3 + $0x228] sm:$0xf] %v836
      %v853 = vld [vmem:[%s820] sm:$0xe]
      %v854 = vld [vmem:[%s820 + $0x4] sm:$0xf]
      %v855 = vld [vmem:[%s820 + $0x8] sm:$0x1]
      %v856 = vld [vmem:[%s820 + $0xc] sm:$0xe]
      %v857 = vld [vmem:[%s820 + $0x10] sm:$0xf]
      %v858 = vld [vmem:[%s820 + $0x14] sm:$0x1]
      %v859 = vld [vmem:[%s820 + $0x18] sm:$0xe]
      %v860 = vld [vmem:[%s820 + $0x1c] sm:$0xf]
      %v861 = vld [vmem:[%s820 + $0x20] sm:$0x1]
      %v862 = vld [vmem:[%s820 + $0x24] sm:$0xe]
      %v863 = vld [vmem:[%s820 + $0x28] sm:$0xf]
      %v864 = vld [vmem:[%s820 + $0x2c] sm:$0x1]
      %v865 = vld [vmem:[%s820 + $0x30] sm:$0xe]
      %v866 = vld [vmem:[%s820 + $0x34] sm:$0xf]
      %v867 = vld [vmem:[%s820 + $0x38] sm:$0x1]
      %v868 = vld [vmem:[%s820 + $0x3c] sm:$0xe]
      %v869 = vld [vmem:[%s820 + $0x40] sm:$0xf]
      %v870 = vld [vmem:[%s820 + $0x44] sm:$0x1]
      %v871 = vld [vmem:[%s820 + $0x48] sm:$0xe]
      %v872 = vld [vmem:[%s820 + $0x4c] sm:$0xf]
      %v873 = vld [vmem:[%s820 + $0x50] sm:$0x1]
      %v874 = vld [vmem:[%s820 + $0x54] sm:$0xe]
      %v875 = vld [vmem:[%s820 + $0x58] sm:$0xf]
      %v876 = vld [vmem:[%s820 + $0x5c] sm:$0x1]
      %v901 = vrot.slane %v853, 5
      %v902 = vrot.slane %v901, 4
      %v903 = vrot.slane %v854, 5
      %v904 = vsel %vm589, %v902, %v903
      %v905 = vrot.slane %v903, 4
      %v906 = vrot.slane %v855, 5
      %v907 = vsel %vm589, %v905, %v906
      %v908 = vrot.slane %v856, 5
      %v909 = vrot.slane %v908, 4
      %v910 = vrot.slane %v857, 5
      %v911 = vsel %vm589, %v909, %v910
      %v912 = vrot.slane %v910, 4
      %v913 = vrot.slane %v858, 5
      %v914 = vsel %vm589, %v912, %v913
      %v915 = vrot.slane %v859, 5
      %v916 = vrot.slane %v915, 4
      %v917 = vrot.slane %v860, 5
      %v918 = vsel %vm589, %v916, %v917
      %v919 = vrot.slane %v917, 4
      %v920 = vrot.slane %v861, 5
      %v921 = vsel %vm589, %v919, %v920
      %v922 = vrot.slane %v862, 5
      %v923 = vrot.slane %v922, 4
      %v924 = vrot.slane %v863, 5
      %v925 = vsel %vm589, %v923, %v924
      %v926 = vrot.slane %v924, 4
      %v927 = vrot.slane %v864, 5
      %v928 = vsel %vm589, %v926, %v927
      %v929 = vrot.slane %v865, 5
      %v930 = vrot.slane %v929, 4
      %v931 = vrot.slane %v866, 5
      %v932 = vsel %vm589, %v930, %v931
      %v933 = vrot.slane %v931, 4
      %v934 = vrot.slane %v867, 5
      %v935 = vsel %vm589, %v933, %v934
      %v936 = vrot.slane %v868, 5
      %v937 = vrot.slane %v936, 4
      %v938 = vrot.slane %v869, 5
      %v939 = vsel %vm589, %v937, %v938
      %v940 = vrot.slane %v938, 4
      %v941 = vrot.slane %v870, 5
      %v942 = vsel %vm589, %v940, %v941
      %v943 = vrot.slane %v871, 5
      %v944 = vrot.slane %v943, 4
      %v945 = vrot.slane %v872, 5
      %v946 = vsel %vm589, %v944, %v945
      %v947 = vrot.slane %v945, 4
      %v948 = vrot.slane %v873, 5
      %v949 = vsel %vm589, %v947, %v948
      %v950 = vrot.slane %v874, 5
      %v951 = vrot.slane %v950, 4
      %v952 = vrot.slane %v875, 5
      %v953 = vsel %vm589, %v951, %v952
      %v954 = vrot.slane %v952, 4
      %v955 = vrot.slane %v876, 5
      %v956 = vsel %vm589, %v954, %v955
      %973 = vst [vmem:[#allocation3 + $0x10] sm:$0xf] %v904
      %974 = vst [vmem:[#allocation3 + $0x34] sm:$0xf] %v907
      %975 = vst [vmem:[#allocation3 + $0x58] sm:$0xf] %v911
      %976 = vst [vmem:[#allocation3 + $0x7c] sm:$0xf] %v914
      %977 = vst [vmem:[#allocation3 + $0xa0] sm:$0xf] %v918
      %978 = vst [vmem:[#allocation3 + $0xc4] sm:$0xf] %v921
      %979 = vst [vmem:[#allocation3 + $0xe8] sm:$0xf] %v925
      %980 = vst [vmem:[#allocation3 + $0x10c] sm:$0xf] %v928
      %981 = vst [vmem:[#allocation3 + $0x130] sm:$0xf] %v932
      %982 = vst [vmem:[#allocation3 + $0x154] sm:$0xf] %v935
      %983 = vst [vmem:[#allocation3 + $0x178] sm:$0xf] %v939
      %984 = vst [vmem:[#allocation3 + $0x19c] sm:$0xf] %v942
      %985 = vst [vmem:[#allocation3 + $0x1c0] sm:$0xf] %v946
      %986 = vst [vmem:[#allocation3 + $0x1e4] sm:$0xf] %v949
      %987 = vst [vmem:[#allocation3 + $0x208] sm:$0xf] %v953
      %988 = vst [vmem:[#allocation3 + $0x22c] sm:$0xf] %v956
      %v989 = vld [vmem:[%s820] sm:$0xc]
      %v990 = vld [vmem:[%s820 + $0x4] sm:$0xf]
      %v991 = vld [vmem:[%s820 + $0x8] sm:$0x3]
      %v992 = vld [vmem:[%s820 + $0xc] sm:$0xc]
      %v993 = vld [vmem:[%s820 + $0x10] sm:$0xf]
      %v994 = vld [vmem:[%s820 + $0x14] sm:$0x3]
      %v995 = vld [vmem:[%s820 + $0x18] sm:$0xc]
      %v996 = vld [vmem:[%s820 + $0x1c] sm:$0xf]
      %v997 = vld [vmem:[%s820 + $0x20] sm:$0x3]
      %v998 = vld [vmem:[%s820 + $0x24] sm:$0xc]
      %v999 = vld [vmem:[%s820 + $0x28] sm:$0xf]
      %v1000 = vld [vmem:[%s820 + $0x2c] sm:$0x3]
      %v1001 = vld [vmem:[%s820 + $0x30] sm:$0xc]
      %v1002 = vld [vmem:[%s820 + $0x34] sm:$0xf]
      %v1003 = vld [vmem:[%s820 + $0x38] sm:$0x3]
      %v1004 = vld [vmem:[%s820 + $0x3c] sm:$0xc]
      %v1005 = vld [vmem:[%s820 + $0x40] sm:$0xf]
      %v1006 = vld [vmem:[%s820 + $0x44] sm:$0x3]
      %v1007 = vld [vmem:[%s820 + $0x48] sm:$0xc]
      %v1008 = vld [vmem:[%s820 + $0x4c] sm:$0xf]
      %v1009 = vld [vmem:[%s820 + $0x50] sm:$0x3]
      %v1010 = vld [vmem:[%s820 + $0x54] sm:$0xc]
      %v1011 = vld [vmem:[%s820 + $0x58] sm:$0xf]
      %v1012 = vld [vmem:[%s820 + $0x5c] sm:$0x3]
      %v1037 = vrot.slane %v989, 6
      %v1038 = vrot.slane %v1037, 4
      %v1039 = vrot.slane %v990, 6
      %v1040 = vsel %vm728, %v1038, %v1039
      %v1041 = vrot.slane %v1039, 4
      %v1042 = vrot.slane %v991, 6
      %v1043 = vsel %vm728, %v1041, %v1042
      %v1044 = vrot.slane %v992, 6
      %v1045 = vrot.slane %v1044, 4
      %v1046 = vrot.slane %v993, 6
      %v1047 = vsel %vm728, %v1045, %v1046
      %v1048 = vrot.slane %v1046, 4
      %v1049 = vrot.slane %v994, 6
      %v1050 = vsel %vm728, %v1048, %v1049
      %v1051 = vrot.slane %v995, 6
      %v1052 = vrot.slane %v1051, 4
      %v1053 = vrot.slane %v996, 6
      %v1054 = vsel %vm728, %v1052, %v1053
      %v1055 = vrot.slane %v1053, 4
      %v1056 = vrot.slane %v997, 6
      %v1057 = vsel %vm728, %v1055, %v1056
      %v1058 = vrot.slane %v998, 6
      %v1059 = vrot.slane %v1058, 4
      %v1060 = vrot.slane %v999, 6
      %v1061 = vsel %vm728, %v1059, %v1060
      %v1062 = vrot.slane %v1060, 4
      %v1063 = vrot.slane %v1000, 6
      %v1064 = vsel %vm728, %v1062, %v1063
      %v1065 = vrot.slane %v1001, 6
      %v1066 = vrot.slane %v1065, 4
      %v1067 = vrot.slane %v1002, 6
      %v1068 = vsel %vm728, %v1066, %v1067
      %v1069 = vrot.slane %v1067, 4
      %v1070 = vrot.slane %v1003, 6
      %v1071 = vsel %vm728, %v1069, %v1070
      %v1072 = vrot.slane %v1004, 6
      %v1073 = vrot.slane %v1072, 4
      %v1074 = vrot.slane %v1005, 6
      %v1075 = vsel %vm728, %v1073, %v1074
      %v1076 = vrot.slane %v1074, 4
      %v1077 = vrot.slane %v1006, 6
      %v1078 = vsel %vm728, %v1076, %v1077
      %v1079 = vrot.slane %v1007, 6
      %v1080 = vrot.slane %v1079, 4
      %v1081 = vrot.slane %v1008, 6
      %v1082 = vsel %vm728, %v1080, %v1081
      %v1083 = vrot.slane %v1081, 4
      %v1084 = vrot.slane %v1009, 6
      %v1085 = vsel %vm728, %v1083, %v1084
      %v1086 = vrot.slane %v1010, 6
      %v1087 = vrot.slane %v1086, 4
      %v1088 = vrot.slane %v1011, 6
      %v1089 = vsel %vm728, %v1087, %v1088
      %v1090 = vrot.slane %v1088, 4
      %v1091 = vrot.slane %v1012, 6
      %v1092 = vsel %vm728, %v1090, %v1091
      %1109 = vst [vmem:[#allocation3 + $0x14] sm:$0xf] %v1040
      %1110 = vst [vmem:[#allocation3 + $0x38] sm:$0xf] %v1043
      %1111 = vst [vmem:[#allocation3 + $0x5c] sm:$0xf] %v1047
      %1112 = vst [vmem:[#allocation3 + $0x80] sm:$0xf] %v1050
      %1113 = vst [vmem:[#allocation3 + $0xa4] sm:$0xf] %v1054
      %1114 = vst [vmem:[#allocation3 + $0xc8] sm:$0xf] %v1057
      %1115 = vst [vmem:[#allocation3 + $0xec] sm:$0xf] %v1061
      %1116 = vst [vmem:[#allocation3 + $0x110] sm:$0xf] %v1064
      %1117 = vst [vmem:[#allocation3 + $0x134] sm:$0xf] %v1068
      %1118 = vst [vmem:[#allocation3 + $0x158] sm:$0xf] %v1071
      %1119 = vst [vmem:[#allocation3 + $0x17c] sm:$0xf] %v1075
      %1120 = vst [vmem:[#allocation3 + $0x1a0] sm:$0xf] %v1078
      %1121 = vst [vmem:[#allocation3 + $0x1c4] sm:$0xf] %v1082
      %1122 = vst [vmem:[#allocation3 + $0x1e8] sm:$0xf] %v1085
      %1123 = vst [vmem:[#allocation3 + $0x20c] sm:$0xf] %v1089
      %1124 = vst [vmem:[#allocation3 + $0x230] sm:$0xf] %v1092
      %s1125 = sadd.s32 %s503, 4
      %s1126 = smul.u32 %s1125, 3
      %s1127 = smul.addr %s1126, 4
      %s1128 = scalar_lea.vmem [#allocation2], %s1127
      %v1129 = vld [vmem:[%s1128] sm:$0xf]
      %v1130 = vld [vmem:[%s1128 + $0x4] sm:$0xf]
      %v1131 = vld [vmem:[%s1128 + $0xc] sm:$0xf]
      %v1132 = vld [vmem:[%s1128 + $0x10] sm:$0xf]
      %v1133 = vld [vmem:[%s1128 + $0x18] sm:$0xf]
      %v1134 = vld [vmem:[%s1128 + $0x1c] sm:$0xf]
      %v1135 = vld [vmem:[%s1128 + $0x24] sm:$0xf]
      %v1136 = vld [vmem:[%s1128 + $0x28] sm:$0xf]
      %v1137 = vld [vmem:[%s1128 + $0x30] sm:$0xf]
      %v1138 = vld [vmem:[%s1128 + $0x34] sm:$0xf]
      %v1139 = vld [vmem:[%s1128 + $0x3c] sm:$0xf]
      %v1140 = vld [vmem:[%s1128 + $0x40] sm:$0xf]
      %v1141 = vld [vmem:[%s1128 + $0x48] sm:$0xf]
      %v1142 = vld [vmem:[%s1128 + $0x4c] sm:$0xf]
      %v1143 = vld [vmem:[%s1128 + $0x54] sm:$0xf]
      %v1144 = vld [vmem:[%s1128 + $0x58] sm:$0xf]
      %1145 = vst [vmem:[#allocation3 + $0x18] sm:$0xf] %v1129
      %1146 = vst [vmem:[#allocation3 + $0x3c] sm:$0xf] %v1130
      %1147 = vst [vmem:[#allocation3 + $0x60] sm:$0xf] %v1131
      %1148 = vst [vmem:[#allocation3 + $0x84] sm:$0xf] %v1132
      %1149 = vst [vmem:[#allocation3 + $0xa8] sm:$0xf] %v1133
      %1150 = vst [vmem:[#allocation3 + $0xcc] sm:$0xf] %v1134
      %1151 = vst [vmem:[#allocation3 + $0xf0] sm:$0xf] %v1135
      %1152 = vst [vmem:[#allocation3 + $0x114] sm:$0xf] %v1136
      %1153 = vst [vmem:[#allocation3 + $0x138] sm:$0xf] %v1137
      %1154 = vst [vmem:[#allocation3 + $0x15c] sm:$0xf] %v1138
      %1155 = vst [vmem:[#allocation3 + $0x180] sm:$0xf] %v1139
      %1156 = vst [vmem:[#allocation3 + $0x1a4] sm:$0xf] %v1140
      %1157 = vst [vmem:[#allocation3 + $0x1c8] sm:$0xf] %v1141
      %1158 = vst [vmem:[#allocation3 + $0x1ec] sm:$0xf] %v1142
      %1159 = vst [vmem:[#allocation3 + $0x210] sm:$0xf] %v1143
      %1160 = vst [vmem:[#allocation3 + $0x234] sm:$0xf] %v1144
      %v1161 = vld [vmem:[%s1128] sm:$0xe]
      %v1162 = vld [vmem:[%s1128 + $0x4] sm:$0xf]
      %v1163 = vld [vmem:[%s1128 + $0x8] sm:$0x1]
      %v1164 = vld [vmem:[%s1128 + $0xc] sm:$0xe]
      %v1165 = vld [vmem:[%s1128 + $0x10] sm:$0xf]
      %v1166 = vld [vmem:[%s1128 + $0x14] sm:$0x1]
      %v1167 = vld [vmem:[%s1128 + $0x18] sm:$0xe]
      %v1168 = vld [vmem:[%s1128 + $0x1c] sm:$0xf]
      %v1169 = vld [vmem:[%s1128 + $0x20] sm:$0x1]
      %v1170 = vld [vmem:[%s1128 + $0x24] sm:$0xe]
      %v1171 = vld [vmem:[%s1128 + $0x28] sm:$0xf]
      %v1172 = vld [vmem:[%s1128 + $0x2c] sm:$0x1]
      %v1173 = vld [vmem:[%s1128 + $0x30] sm:$0xe]
      %v1174 = vld [vmem:[%s1128 + $0x34] sm:$0xf]
      %v1175 = vld [vmem:[%s1128 + $0x38] sm:$0x1]
      %v1176 = vld [vmem:[%s1128 + $0x3c] sm:$0xe]
      %v1177 = vld [vmem:[%s1128 + $0x40] sm:$0xf]
      %v1178 = vld [vmem:[%s1128 + $0x44] sm:$0x1]
      %v1179 = vld [vmem:[%s1128 + $0x48] sm:$0xe]
      %v1180 = vld [vmem:[%s1128 + $0x4c] sm:$0xf]
      %v1181 = vld [vmem:[%s1128 + $0x50] sm:$0x1]
      %v1182 = vld [vmem:[%s1128 + $0x54] sm:$0xe]
      %v1183 = vld [vmem:[%s1128 + $0x58] sm:$0xf]
      %v1184 = vld [vmem:[%s1128 + $0x5c] sm:$0x1]
      %v1209 = vrot.slane %v1161, 5
      %v1210 = vrot.slane %v1209, 4
      %v1211 = vrot.slane %v1162, 5
      %v1212 = vsel %vm589, %v1210, %v1211
      %v1213 = vrot.slane %v1211, 4
      %v1214 = vrot.slane %v1163, 5
      %v1215 = vsel %vm589, %v1213, %v1214
      %v1216 = vrot.slane %v1164, 5
      %v1217 = vrot.slane %v1216, 4
      %v1218 = vrot.slane %v1165, 5
      %v1219 = vsel %vm589, %v1217, %v1218
      %v1220 = vrot.slane %v1218, 4
      %v1221 = vrot.slane %v1166, 5
      %v1222 = vsel %vm589, %v1220, %v1221
      %v1223 = vrot.slane %v1167, 5
      %v1224 = vrot.slane %v1223, 4
      %v1225 = vrot.slane %v1168, 5
      %v1226 = vsel %vm589, %v1224, %v1225
      %v1227 = vrot.slane %v1225, 4
      %v1228 = vrot.slane %v1169, 5
      %v1229 = vsel %vm589, %v1227, %v1228
      %v1230 = vrot.slane %v1170, 5
      %v1231 = vrot.slane %v1230, 4
      %v1232 = vrot.slane %v1171, 5
      %v1233 = vsel %vm589, %v1231, %v1232
      %v1234 = vrot.slane %v1232, 4
      %v1235 = vrot.slane %v1172, 5
      %v1236 = vsel %vm589, %v1234, %v1235
      %v1237 = vrot.slane %v1173, 5
      %v1238 = vrot.slane %v1237, 4
      %v1239 = vrot.slane %v1174, 5
      %v1240 = vsel %vm589, %v1238, %v1239
      %v1241 = vrot.slane %v1239, 4
      %v1242 = vrot.slane %v1175, 5
      %v1243 = vsel %vm589, %v1241, %v1242
      %v1244 = vrot.slane %v1176, 5
      %v1245 = vrot.slane %v1244, 4
      %v1246 = vrot.slane %v1177, 5
      %v1247 = vsel %vm589, %v1245, %v1246
      %v1248 = vrot.slane %v1246, 4
      %v1249 = vrot.slane %v1178, 5
      %v1250 = vsel %vm589, %v1248, %v1249
      %v1251 = vrot.slane %v1179, 5
      %v1252 = vrot.slane %v1251, 4
      %v1253 = vrot.slane %v1180, 5
      %v1254 = vsel %vm589, %v1252, %v1253
      %v1255 = vrot.slane %v1253, 4
      %v1256 = vrot.slane %v1181, 5
      %v1257 = vsel %vm589, %v1255, %v1256
      %v1258 = vrot.slane %v1182, 5
      %v1259 = vrot.slane %v1258, 4
      %v1260 = vrot.slane %v1183, 5
      %v1261 = vsel %vm589, %v1259, %v1260
      %v1262 = vrot.slane %v1260, 4
      %v1263 = vrot.slane %v1184, 5
      %v1264 = vsel %vm589, %v1262, %v1263
      %1281 = vst [vmem:[#allocation3 + $0x1c] sm:$0xf] %v1212
      %1282 = vst [vmem:[#allocation3 + $0x40] sm:$0xf] %v1215
      %1283 = vst [vmem:[#allocation3 + $0x64] sm:$0xf] %v1219
      %1284 = vst [vmem:[#allocation3 + $0x88] sm:$0xf] %v1222
      %1285 = vst [vmem:[#allocation3 + $0xac] sm:$0xf] %v1226
      %1286 = vst [vmem:[#allocation3 + $0xd0] sm:$0xf] %v1229
      %1287 = vst [vmem:[#allocation3 + $0xf4] sm:$0xf] %v1233
      %1288 = vst [vmem:[#allocation3 + $0x118] sm:$0xf] %v1236
      %1289 = vst [vmem:[#allocation3 + $0x13c] sm:$0xf] %v1240
      %1290 = vst [vmem:[#allocation3 + $0x160] sm:$0xf] %v1243
      %1291 = vst [vmem:[#allocation3 + $0x184] sm:$0xf] %v1247
      %1292 = vst [vmem:[#allocation3 + $0x1a8] sm:$0xf] %v1250
      %1293 = vst [vmem:[#allocation3 + $0x1cc] sm:$0xf] %v1254
      %1294 = vst [vmem:[#allocation3 + $0x1f0] sm:$0xf] %v1257
      %1295 = vst [vmem:[#allocation3 + $0x214] sm:$0xf] %v1261
      %1296 = vst [vmem:[#allocation3 + $0x238] sm:$0xf] %v1264
      %v1297 = vld [vmem:[%s1128] sm:$0xc]
      %v1298 = vld [vmem:[%s1128 + $0x4] sm:$0xf]
      %v1299 = vld [vmem:[%s1128 + $0x8] sm:$0x3]
      %v1300 = vld [vmem:[%s1128 + $0xc] sm:$0xc]
      %v1301 = vld [vmem:[%s1128 + $0x10] sm:$0xf]
      %v1302 = vld [vmem:[%s1128 + $0x14] sm:$0x3]
      %v1303 = vld [vmem:[%s1128 + $0x18] sm:$0xc]
      %v1304 = vld [vmem:[%s1128 + $0x1c] sm:$0xf]
      %v1305 = vld [vmem:[%s1128 + $0x20] sm:$0x3]
      %v1306 = vld [vmem:[%s1128 + $0x24] sm:$0xc]
      %v1307 = vld [vmem:[%s1128 + $0x28] sm:$0xf]
      %v1308 = vld [vmem:[%s1128 + $0x2c] sm:$0x3]
      %v1309 = vld [vmem:[%s1128 + $0x30] sm:$0xc]
      %v1310 = vld [vmem:[%s1128 + $0x34] sm:$0xf]
      %v1311 = vld [vmem:[%s1128 + $0x38] sm:$0x3]
      %v1312 = vld [vmem:[%s1128 + $0x3c] sm:$0xc]
      %v1313 = vld [vmem:[%s1128 + $0x40] sm:$0xf]
      %v1314 = vld [vmem:[%s1128 + $0x44] sm:$0x3]
      %v1315 = vld [vmem:[%s1128 + $0x48] sm:$0xc]
      %v1316 = vld [vmem:[%s1128 + $0x4c] sm:$0xf]
      %v1317 = vld [vmem:[%s1128 + $0x50] sm:$0x3]
      %v1318 = vld [vmem:[%s1128 + $0x54] sm:$0xc]
      %v1319 = vld [vmem:[%s1128 + $0x58] sm:$0xf]
      %v1320 = vld [vmem:[%s1128 + $0x5c] sm:$0x3]
      %v1345 = vrot.slane %v1297, 6
      %v1346 = vrot.slane %v1345, 4
      %v1347 = vrot.slane %v1298, 6
      %v1348 = vsel %vm728, %v1346, %v1347
      %v1349 = vrot.slane %v1347, 4
      %v1350 = vrot.slane %v1299, 6
      %v1351 = vsel %vm728, %v1349, %v1350
      %v1352 = vrot.slane %v1300, 6
      %v1353 = vrot.slane %v1352, 4
      %v1354 = vrot.slane %v1301, 6
      %v1355 = vsel %vm728, %v1353, %v1354
      %v1356 = vrot.slane %v1354, 4
      %v1357 = vrot.slane %v1302, 6
      %v1358 = vsel %vm728, %v1356, %v1357
      %v1359 = vrot.slane %v1303, 6
      %v1360 = vrot.slane %v1359, 4
      %v1361 = vrot.slane %v1304, 6
      %v1362 = vsel %vm728, %v1360, %v1361
      %v1363 = vrot.slane %v1361, 4
      %v1364 = vrot.slane %v1305, 6
      %v1365 = vsel %vm728, %v1363, %v1364
      %v1366 = vrot.slane %v1306, 6
      %v1367 = vrot.slane %v1366, 4
      %v1368 = vrot.slane %v1307, 6
      %v1369 = vsel %vm728, %v1367, %v1368
      %v1370 = vrot.slane %v1368, 4
      %v1371 = vrot.slane %v1308, 6
      %v1372 = vsel %vm728, %v1370, %v1371
      %v1373 = vrot.slane %v1309, 6
      %v1374 = vrot.slane %v1373, 4
      %v1375 = vrot.slane %v1310, 6
      %v1376 = vsel %vm728, %v1374, %v1375
      %v1377 = vrot.slane %v1375, 4
      %v1378 = vrot.slane %v1311, 6
      %v1379 = vsel %vm728, %v1377, %v1378
      %v1380 = vrot.slane %v1312, 6
      %v1381 = vrot.slane %v1380, 4
      %v1382 = vrot.slane %v1313, 6
      %v1383 = vsel %vm728, %v1381, %v1382
      %v1384 = vrot.slane %v1382, 4
      %v1385 = vrot.slane %v1314, 6
      %v1386 = vsel %vm728, %v1384, %v1385
      %v1387 = vrot.slane %v1315, 6
      %v1388 = vrot.slane %v1387, 4
      %v1389 = vrot.slane %v1316, 6
      %v1390 = vsel %vm728, %v1388, %v1389
      %v1391 = vrot.slane %v1389, 4
      %v1392 = vrot.slane %v1317, 6
      %v1393 = vsel %vm728, %v1391, %v1392
      %v1394 = vrot.slane %v1318, 6
      %v1395 = vrot.slane %v1394, 4
      %v1396 = vrot.slane %v1319, 6
      %v1397 = vsel %vm728, %v1395, %v1396
      %v1398 = vrot.slane %v1396, 4
      %v1399 = vrot.slane %v1320, 6
      %v1400 = vsel %vm728, %v1398, %v1399
      %1417 = vst [vmem:[#allocation3 + $0x20] sm:$0xf] %v1348
      %1418 = vst [vmem:[#allocation3 + $0x44] sm:$0xf] %v1351
      %1419 = vst [vmem:[#allocation3 + $0x68] sm:$0xf] %v1355
      %1420 = vst [vmem:[#allocation3 + $0x8c] sm:$0xf] %v1358
      %1421 = vst [vmem:[#allocation3 + $0xb0] sm:$0xf] %v1362
      %1422 = vst [vmem:[#allocation3 + $0xd4] sm:$0xf] %v1365
      %1423 = vst [vmem:[#allocation3 + $0xf8] sm:$0xf] %v1369
      %1424 = vst [vmem:[#allocation3 + $0x11c] sm:$0xf] %v1372
      %1425 = vst [vmem:[#allocation3 + $0x140] sm:$0xf] %v1376
      %1426 = vst [vmem:[#allocation3 + $0x164] sm:$0xf] %v1379
      %1427 = vst [vmem:[#allocation3 + $0x188] sm:$0xf] %v1383
      %1428 = vst [vmem:[#allocation3 + $0x1ac] sm:$0xf] %v1386
      %1429 = vst [vmem:[#allocation3 + $0x1d0] sm:$0xf] %v1390
      %1430 = vst [vmem:[#allocation3 + $0x1f4] sm:$0xf] %v1393
      %1431 = vst [vmem:[#allocation3 + $0x218] sm:$0xf] %v1397
      %1432 = vst [vmem:[#allocation3 + $0x23c] sm:$0xf] %v1400
      %v1433 = vld [vmem:[#allocation3] sm:$0xff]
      %v1434 = vld [vmem:[#allocation3 + $0x8] sm:$0xff]
      %v1435 = vld [vmem:[#allocation3 + $0x10] sm:$0xff]
      %v1436 = vld [vmem:[#allocation3 + $0x18] sm:$0xff]
      %v1437 = vld [vmem:[#allocation3 + $0x20] sm:$0xf]
      %v1438 = vld [vmem:[#allocation3 + $0x24] sm:$0xff]
      %v1439 = vld [vmem:[#allocation3 + $0x2c] sm:$0xff]
      %v1440 = vld [vmem:[#allocation3 + $0x34] sm:$0xff]
      %v1441 = vld [vmem:[#allocation3 + $0x3c] sm:$0xff]
      %v1442 = vld [vmem:[#allocation3 + $0x44] sm:$0xf]
      %v1443 = vld [vmem:[#allocation3 + $0x48] sm:$0xff]
      %v1444 = vld [vmem:[#allocation3 + $0x50] sm:$0xff]
      %v1445 = vld [vmem:[#allocation3 + $0x58] sm:$0xff]
      %v1446 = vld [vmem:[#allocation3 + $0x60] sm:$0xff]
      %v1447 = vld [vmem:[#allocation3 + $0x68] sm:$0xf]
      %v1448 = vld [vmem:[#allocation3 + $0x6c] sm:$0xff]
      %v1449 = vld [vmem:[#allocation3 + $0x74] sm:$0xff]
      %v1450 = vld [vmem:[#allocation3 + $0x7c] sm:$0xff]
      %v1451 = vld [vmem:[#allocation3 + $0x84] sm:$0xff]
      %v1452 = vld [vmem:[#allocation3 + $0x8c] sm:$0xf]
      %v1453 = vld [vmem:[#allocation3 + $0x90] sm:$0xff]
      %v1454 = vld [vmem:[#allocation3 + $0x98] sm:$0xff]
      %v1455 = vld [vmem:[#allocation3 + $0xa0] sm:$0xff]
      %v1456 = vld [vmem:[#allocation3 + $0xa8] sm:$0xff]
      %v1457 = vld [vmem:[#allocation3 + $0xb0] sm:$0xf]
      %v1458 = vld [vmem:[#allocation3 + $0xb4] sm:$0xff]
      %v1459 = vld [vmem:[#allocation3 + $0xbc] sm:$0xff]
      %v1460 = vld [vmem:[#allocation3 + $0xc4] sm:$0xff]
      %v1461 = vld [vmem:[#allocation3 + $0xcc] sm:$0xff]
      %v1462 = vld [vmem:[#allocation3 + $0xd4] sm:$0xf]
      %v1463 = vld [vmem:[#allocation3 + $0xd8] sm:$0xff]
      %v1464 = vld [vmem:[#allocation3 + $0xe0] sm:$0xff]
      %v1465 = vld [vmem:[#allocation3 + $0xe8] sm:$0xff]
      %v1466 = vld [vmem:[#allocation3 + $0xf0] sm:$0xff]
      %v1467 = vld [vmem:[#allocation3 + $0xf8] sm:$0xf]
      %v1468 = vld [vmem:[#allocation3 + $0xfc] sm:$0xff]
      %v1469 = vld [vmem:[#allocation3 + $0x104] sm:$0xff]
      %v1470 = vld [vmem:[#allocation3 + $0x10c] sm:$0xff]
      %v1471 = vld [vmem:[#allocation3 + $0x114] sm:$0xff]
      %v1472 = vld [vmem:[#allocation3 + $0x11c] sm:$0xf]
      %v1473 = vld [vmem:[#allocation3 + $0x120] sm:$0xff]
      %v1474 = vld [vmem:[#allocation3 + $0x128] sm:$0xff]
      %v1475 = vld [vmem:[#allocation3 + $0x130] sm:$0xff]
      %v1476 = vld [vmem:[#allocation3 + $0x138] sm:$0xff]
      %v1477 = vld [vmem:[#allocation3 + $0x140] sm:$0xf]
      %v1478 = vld [vmem:[#allocation3 + $0x144] sm:$0xff]
      %v1479 = vld [vmem:[#allocation3 + $0x14c] sm:$0xff]
      %v1480 = vld [vmem:[#allocation3 + $0x154] sm:$0xff]
      %v1481 = vld [vmem:[#allocation3 + $0x15c] sm:$0xff]
      %v1482 = vld [vmem:[#allocation3 + $0x164] sm:$0xf]
      %v1483 = vld [vmem:[#allocation3 + $0x168] sm:$0xff]
      %v1484 = vld [vmem:[#allocation3 + $0x170] sm:$0xff]
      %v1485 = vld [vmem:[#allocation3 + $0x178] sm:$0xff]
      %v1486 = vld [vmem:[#allocation3 + $0x180] sm:$0xff]
      %v1487 = vld [vmem:[#allocation3 + $0x188] sm:$0xf]
      %v1488 = vld [vmem:[#allocation3 + $0x18c] sm:$0xff]
      %v1489 = vld [vmem:[#allocation3 + $0x194] sm:$0xff]
      %v1490 = vld [vmem:[#allocation3 + $0x19c] sm:$0xff]
      %v1491 = vld [vmem:[#allocation3 + $0x1a4] sm:$0xff]
      %v1492 = vld [vmem:[#allocation3 + $0x1ac] sm:$0xf]
      %v1493 = vld [vmem:[#allocation3 + $0x1b0] sm:$0xff]
      %v1494 = vld [vmem:[#allocation3 + $0x1b8] sm:$0xff]
      %v1495 = vld [vmem:[#allocation3 + $0x1c0] sm:$0xff]
      %v1496 = vld [vmem:[#allocation3 + $0x1c8] sm:$0xff]
      %v1497 = vld [vmem:[#allocation3 + $0x1d0] sm:$0xf]
      %v1498 = vld [vmem:[#allocation3 + $0x1d4] sm:$0xff]
      %v1499 = vld [vmem:[#allocation3 + $0x1dc] sm:$0xff]
      %v1500 = vld [vmem:[#allocation3 + $0x1e4] sm:$0xff]
      %v1501 = vld [vmem:[#allocation3 + $0x1ec] sm:$0xff]
      %v1502 = vld [vmem:[#allocation3 + $0x1f4] sm:$0xf]
      %v1503 = vld [vmem:[#allocation3 + $0x1f8] sm:$0xff]
      %v1504 = vld [vmem:[#allocation3 + $0x200] sm:$0xff]
      %v1505 = vld [vmem:[#allocation3 + $0x208] sm:$0xff]
      %v1506 = vld [vmem:[#allocation3 + $0x210] sm:$0xff]
      %v1507 = vld [vmem:[#allocation3 + $0x218] sm:$0xf]
      %v1508 = vld [vmem:[#allocation3 + $0x21c] sm:$0xff]
      %v1509 = vld [vmem:[#allocation3 + $0x224] sm:$0xff]
      %v1510 = vld [vmem:[#allocation3 + $0x22c] sm:$0xff]
      %v1511 = vld [vmem:[#allocation3 + $0x234] sm:$0xff]
      %v1512 = vld [vmem:[#allocation3 + $0x23c] sm:$0xf]
      %v1513 = vld [vmem:[%s1] sm:$0xf]
      %v1514 = vld [vmem:[%s1 + $0x4] sm:$0xf]
      %v1515 = vld [vmem:[%s1 + $0x8] sm:$0xf]
      %v1516 = vld [vmem:[%s1 + $0xc] sm:$0xf]
      %v1517 = vld [vmem:[%s1 + $0x10] sm:$0xf]
      %v1518 = vld [vmem:[%s1 + $0x14] sm:$0xf]
      %v1519 = vld [vmem:[%s1 + $0x18] sm:$0xf]
      %v1520 = vld [vmem:[%s1 + $0x1c] sm:$0xf]
      %v1521 = vld [vmem:[%s1 + $0x20] sm:$0xf]
      %v1522 = vld [vmem:[%s1 + $0x24] sm:$0xf]
      %v1523 = vld [vmem:[%s1 + $0x28] sm:$0xf]
      %v1524 = vld [vmem:[%s1 + $0x2c] sm:$0xf]
      %v1525 = vld [vmem:[%s1 + $0x30] sm:$0xf]
      %v1526 = vld [vmem:[%s1 + $0x34] sm:$0xf]
      %v1527 = vld [vmem:[%s1 + $0x38] sm:$0xf]
      %v1528 = vld [vmem:[%s1 + $0x3c] sm:$0xf]
      %v1529 = vld [vmem:[%s1 + $0x40] sm:$0xf]
      %v1530 = vld [vmem:[%s1 + $0x44] sm:$0xf]
      %v1531 = vld [vmem:[%s1 + $0x48] sm:$0xf]
      %v1532 = vld [vmem:[%s1 + $0x4c] sm:$0xf]
      %v1533 = vld [vmem:[%s1 + $0x50] sm:$0xf]
      %v1534 = vld [vmem:[%s1 + $0x54] sm:$0xf]
      %v1535 = vld [vmem:[%s1 + $0x58] sm:$0xf]
      %v1536 = vld [vmem:[%s1 + $0x5c] sm:$0xf]
      %v1537 = vld [vmem:[%s1 + $0x60] sm:$0xf]
      %v1538 = vld [vmem:[%s1 + $0x64] sm:$0xf]
      %v1539 = vld [vmem:[%s1 + $0x68] sm:$0xf]
      %v1540 = vld [vmem:[%s1 + $0x6c] sm:$0xf]
      %v1541 = vld [vmem:[%s1 + $0x70] sm:$0xf]
      %v1542 = vld [vmem:[%s1 + $0x74] sm:$0xf]
      %v1543 = vld [vmem:[%s1 + $0x78] sm:$0xf]
      %v1544 = vld [vmem:[%s1 + $0x7c] sm:$0xf]
      %v1545 = vld [vmem:[%s1 + $0x80] sm:$0xf]
      %v1546 = vld [vmem:[%s1 + $0x84] sm:$0xf]
      %v1547 = vld [vmem:[%s1 + $0x88] sm:$0xf]
      %v1548 = vld [vmem:[%s1 + $0x8c] sm:$0xf]
      %v1549 = vld [vmem:[%s1 + $0x90] sm:$0xf]
      %v1550 = vld [vmem:[%s1 + $0x94] sm:$0xf]
      %v1551 = vld [vmem:[%s1 + $0x98] sm:$0xf]
      %v1552 = vld [vmem:[%s1 + $0x9c] sm:$0xf]
      %v1553 = vld [vmem:[%s1 + $0xa0] sm:$0xf]
      %v1554 = vld [vmem:[%s1 + $0xa4] sm:$0xf]
      %v1555 = vld [vmem:[%s1 + $0xa8] sm:$0xf]
      %v1556 = vld [vmem:[%s1 + $0xac] sm:$0xf]
      %v1557 = vld [vmem:[%s1 + $0xb0] sm:$0xf]
      %v1558 = vld [vmem:[%s1 + $0xb4] sm:$0xf]
      %v1559 = vld [vmem:[%s1 + $0xb8] sm:$0xf]
      %v1560 = vld [vmem:[%s1 + $0xbc] sm:$0xf]
      %v1561 = vld [vmem:[%s1 + $0xc0] sm:$0xf]
      %v1562 = vld [vmem:[%s1 + $0xc4] sm:$0xf]
      %v1563 = vld [vmem:[%s1 + $0xc8] sm:$0xf]
      %v1564 = vld [vmem:[%s1 + $0xcc] sm:$0xf]
      %v1565 = vld [vmem:[%s1 + $0xd0] sm:$0xf]
      %v1566 = vld [vmem:[%s1 + $0xd4] sm:$0xf]
      %v1567 = vld [vmem:[%s1 + $0xd8] sm:$0xf]
      %v1568 = vld [vmem:[%s1 + $0xdc] sm:$0xf]
      %v1569 = vld [vmem:[%s1 + $0xe0] sm:$0xf]
      %v1570 = vld [vmem:[%s1 + $0xe4] sm:$0xf]
      %v1571 = vld [vmem:[%s1 + $0xe8] sm:$0xf]
      %v1572 = vld [vmem:[%s1 + $0xec] sm:$0xf]
      %v1573 = vld [vmem:[%s1 + $0xf0] sm:$0xf]
      %v1574 = vld [vmem:[%s1 + $0xf4] sm:$0xf]
      %v1575 = vld [vmem:[%s1 + $0xf8] sm:$0xf]
      %v1576 = vld [vmem:[%s1 + $0xfc] sm:$0xf]
      %v1577 = vld [vmem:[%s1 + $0x100] sm:$0xf]
      %v1578 = vld [vmem:[%s1 + $0x104] sm:$0xf]
      %v1579 = vld [vmem:[%s1 + $0x108] sm:$0xf]
      %v1580 = vld [vmem:[%s1 + $0x10c] sm:$0xf]
      %v1581 = vld [vmem:[%s1 + $0x110] sm:$0xf]
      %v1582 = vld [vmem:[%s1 + $0x114] sm:$0xf]
      %v1583 = vld [vmem:[%s1 + $0x118] sm:$0xf]
      %v1584 = vld [vmem:[%s1 + $0x11c] sm:$0xf]
      %v1585 = vld [vmem:[%s1 + $0x120] sm:$0xf]
      %v1586 = vld [vmem:[%s1 + $0x124] sm:$0xf]
      %v1587 = vld [vmem:[%s1 + $0x128] sm:$0xf]
      %v1588 = vld [vmem:[%s1 + $0x12c] sm:$0xf]
      %v1589 = vld [vmem:[%s1 + $0x130] sm:$0xf]
      %v1590 = vld [vmem:[%s1 + $0x134] sm:$0xf]
      %v1591 = vld [vmem:[%s1 + $0x138] sm:$0xf]
      %v1592 = vld [vmem:[%s1 + $0x13c] sm:$0xf]
      %v1593 = vld [vmem:[%s1 + $0x140] sm:$0xf]
      %v1594 = vld [vmem:[%s1 + $0x144] sm:$0xf]
      %v1595 = vld [vmem:[%s1 + $0x148] sm:$0xf]
      %v1596 = vld [vmem:[%s1 + $0x14c] sm:$0xf]
      %v1597 = vld [vmem:[%s1 + $0x150] sm:$0xf]
      %v1598 = vld [vmem:[%s1 + $0x154] sm:$0xf]
      %v1599 = vld [vmem:[%s1 + $0x158] sm:$0xf]
      %v1600 = vld [vmem:[%s1 + $0x15c] sm:$0xf]
      %v1601 = vld [vmem:[%s1 + $0x160] sm:$0xf]
      %v1602 = vld [vmem:[%s1 + $0x164] sm:$0xf]
      %v1603 = vld [vmem:[%s1 + $0x168] sm:$0xf]
      %v1604 = vld [vmem:[%s1 + $0x16c] sm:$0xf]
      %v1605 = vld [vmem:[%s1 + $0x170] sm:$0xf]
      %v1606 = vld [vmem:[%s1 + $0x174] sm:$0xf]
      %v1607 = vld [vmem:[%s1 + $0x178] sm:$0xf]
      %v1608 = vld [vmem:[%s1 + $0x17c] sm:$0xf]
      %v1609 = vld [vmem:[%s1 + $0x180] sm:$0xf]
      %v1610 = vld [vmem:[%s1 + $0x184] sm:$0xf]
      %v1611 = vld [vmem:[%s1 + $0x188] sm:$0xf]
      %v1612 = vld [vmem:[%s1 + $0x18c] sm:$0xf]
      %v1613 = vld [vmem:[%s1 + $0x190] sm:$0xf]
      %v1614 = vld [vmem:[%s1 + $0x194] sm:$0xf]
      %v1615 = vld [vmem:[%s1 + $0x198] sm:$0xf]
      %v1616 = vld [vmem:[%s1 + $0x19c] sm:$0xf]
      %v1617 = vld [vmem:[%s1 + $0x1a0] sm:$0xf]
      %v1618 = vld [vmem:[%s1 + $0x1a4] sm:$0xf]
      %v1619 = vld [vmem:[%s1 + $0x1a8] sm:$0xf]
      %v1620 = vld [vmem:[%s1 + $0x1ac] sm:$0xf]
      %v1621 = vld [vmem:[%s1 + $0x1b0] sm:$0xf]
      %v1622 = vld [vmem:[%s1 + $0x1b4] sm:$0xf]
      %v1623 = vld [vmem:[%s1 + $0x1b8] sm:$0xf]
      %v1624 = vld [vmem:[%s1 + $0x1bc] sm:$0xf]
      %v1625 = vld [vmem:[%s1 + $0x1c0] sm:$0xf]
      %v1626 = vld [vmem:[%s1 + $0x1c4] sm:$0xf]
      %v1627 = vld [vmem:[%s1 + $0x1c8] sm:$0xf]
      %v1628 = vld [vmem:[%s1 + $0x1cc] sm:$0xf]
      %v1629 = vld [vmem:[%s1 + $0x1d0] sm:$0xf]
      %v1630 = vld [vmem:[%s1 + $0x1d4] sm:$0xf]
      %v1631 = vld [vmem:[%s1 + $0x1d8] sm:$0xf]
      %v1632 = vld [vmem:[%s1 + $0x1dc] sm:$0xf]
      %v1633 = vld [vmem:[%s1 + $0x1e0] sm:$0xf]
      %v1634 = vld [vmem:[%s1 + $0x1e4] sm:$0xf]
      %v1635 = vld [vmem:[%s1 + $0x1e8] sm:$0xf]
      %v1636 = vld [vmem:[%s1 + $0x1ec] sm:$0xf]
      %v1637 = vld [vmem:[%s1 + $0x1f0] sm:$0xf]
      %v1638 = vld [vmem:[%s1 + $0x1f4] sm:$0xf]
      %v1639 = vld [vmem:[%s1 + $0x1f8] sm:$0xf]
      %v1640 = vld [vmem:[%s1 + $0x1fc] sm:$0xf]
      %v1641 = vld [vmem:[%s1 + $0x200] sm:$0xf]
      %v1642 = vld [vmem:[%s1 + $0x204] sm:$0xf]
      %v1643 = vld [vmem:[%s1 + $0x208] sm:$0xf]
      %v1644 = vld [vmem:[%s1 + $0x20c] sm:$0xf]
      %v1645 = vld [vmem:[%s1 + $0x210] sm:$0xf]
      %v1646 = vld [vmem:[%s1 + $0x214] sm:$0xf]
      %v1647 = vld [vmem:[%s1 + $0x218] sm:$0xf]
      %v1648 = vld [vmem:[%s1 + $0x21c] sm:$0xf]
      %v1649 = vld [vmem:[%s1 + $0x220] sm:$0xf]
      %v1650 = vld [vmem:[%s1 + $0x224] sm:$0xf]
      %v1651 = vld [vmem:[%s1 + $0x228] sm:$0xf]
      %v1652 = vld [vmem:[%s1 + $0x22c] sm:$0xf]
      %v1653 = vld [vmem:[%s1 + $0x230] sm:$0xf]
      %v1654 = vld [vmem:[%s1 + $0x234] sm:$0xf]
      %v1655 = vld [vmem:[%s1 + $0x238] sm:$0xf]
      %v1656 = vld [vmem:[%s1 + $0x23c] sm:$0xf]
      %v1657 = vld [vmem:[%s2] sm:$0x1]
      %v1659 = vperm.slane %v1657, 0
      %v1741 = vunpack.c.l.b16 %v1433
      %v1742 = vunpack.c.h.b16 %v1433
      %v1743 = vunpack.c.l.b16 %v1434
      %v1744 = vunpack.c.h.b16 %v1434
      %v1745 = vunpack.c.l.b16 %v1435
      %v1746 = vunpack.c.h.b16 %v1435
      %v1747 = vunpack.c.l.b16 %v1436
      %v1748 = vunpack.c.h.b16 %v1436
      %v1749 = vunpack.c.l.b16 %v1437
      %v1750 = vunpack.c.l.b16 %v1438
      %v1751 = vunpack.c.h.b16 %v1438
      %v1752 = vunpack.c.l.b16 %v1439
      %v1753 = vunpack.c.h.b16 %v1439
      %v1754 = vunpack.c.l.b16 %v1440
      %v1755 = vunpack.c.h.b16 %v1440
      %v1756 = vunpack.c.l.b16 %v1441
      %v1757 = vunpack.c.h.b16 %v1441
      %v1758 = vunpack.c.l.b16 %v1442
      %v1759 = vunpack.c.l.b16 %v1443
      %v1760 = vunpack.c.h.b16 %v1443
      %v1761 = vunpack.c.l.b16 %v1444
      %v1762 = vunpack.c.h.b16 %v1444
      %v1763 = vunpack.c.l.b16 %v1445
      %v1764 = vunpack.c.h.b16 %v1445
      %v1765 = vunpack.c.l.b16 %v1446
      %v1766 = vunpack.c.h.b16 %v1446
      %v1767 = vunpack.c.l.b16 %v1447
      %v1768 = vunpack.c.l.b16 %v1448
      %v1769 = vunpack.c.h.b16 %v1448
      %v1770 = vunpack.c.l.b16 %v1449
      %v1771 = vunpack.c.h.b16 %v1449
      %v1772 = vunpack.c.l.b16 %v1450
      %v1773 = vunpack.c.h.b16 %v1450
      %v1774 = vunpack.c.l.b16 %v1451
      %v1775 = vunpack.c.h.b16 %v1451
      %v1776 = vunpack.c.l.b16 %v1452
      %v1777 = vunpack.c.l.b16 %v1453
      %v1778 = vunpack.c.h.b16 %v1453
      %v1779 = vunpack.c.l.b16 %v1454
      %v1780 = vunpack.c.h.b16 %v1454
      %v1781 = vunpack.c.l.b16 %v1455
      %v1782 = vunpack.c.h.b16 %v1455
      %v1783 = vunpack.c.l.b16 %v1456
      %v1784 = vunpack.c.h.b16 %v1456
      %v1785 = vunpack.c.l.b16 %v1457
      %v1786 = vunpack.c.l.b16 %v1458
      %v1787 = vunpack.c.h.b16 %v1458
      %v1788 = vunpack.c.l.b16 %v1459
      %v1789 = vunpack.c.h.b16 %v1459
      %v1790 = vunpack.c.l.b16 %v1460
      %v1791 = vunpack.c.h.b16 %v1460
      %v1792 = vunpack.c.l.b16 %v1461
      %v1793 = vunpack.c.h.b16 %v1461
      %v1794 = vunpack.c.l.b16 %v1462
      %v1795 = vunpack.c.l.b16 %v1463
      %v1796 = vunpack.c.h.b16 %v1463
      %v1797 = vunpack.c.l.b16 %v1464
      %v1798 = vunpack.c.h.b16 %v1464
      %v1799 = vunpack.c.l.b16 %v1465
      %v1800 = vunpack.c.h.b16 %v1465
      %v1801 = vunpack.c.l.b16 %v1466
      %v1802 = vunpack.c.h.b16 %v1466
      %v1803 = vunpack.c.l.b16 %v1467
      %v1804 = vunpack.c.l.b16 %v1468
      %v1805 = vunpack.c.h.b16 %v1468
      %v1806 = vunpack.c.l.b16 %v1469
      %v1807 = vunpack.c.h.b16 %v1469
      %v1808 = vunpack.c.l.b16 %v1470
      %v1809 = vunpack.c.h.b16 %v1470
      %v1810 = vunpack.c.l.b16 %v1471
      %v1811 = vunpack.c.h.b16 %v1471
      %v1812 = vunpack.c.l.b16 %v1472
      %v1813 = vunpack.c.l.b16 %v1473
      %v1814 = vunpack.c.h.b16 %v1473
      %v1815 = vunpack.c.l.b16 %v1474
      %v1816 = vunpack.c.h.b16 %v1474
      %v1817 = vunpack.c.l.b16 %v1475
      %v1818 = vunpack.c.h.b16 %v1475
      %v1819 = vunpack.c.l.b16 %v1476
      %v1820 = vunpack.c.h.b16 %v1476
      %v1821 = vunpack.c.l.b16 %v1477
      %v1822 = vunpack.c.l.b16 %v1478
      %v1823 = vunpack.c.h.b16 %v1478
      %v1824 = vunpack.c.l.b16 %v1479
      %v1825 = vunpack.c.h.b16 %v1479
      %v1826 = vunpack.c.l.b16 %v1480
      %v1827 = vunpack.c.h.b16 %v1480
      %v1828 = vunpack.c.l.b16 %v1481
      %v1829 = vunpack.c.h.b16 %v1481
      %v1830 = vunpack.c.l.b16 %v1482
      %v1831 = vunpack.c.l.b16 %v1483
      %v1832 = vunpack.c.h.b16 %v1483
      %v1833 = vunpack.c.l.b16 %v1484
      %v1834 = vunpack.c.h.b16 %v1484
      %v1835 = vunpack.c.l.b16 %v1485
      %v1836 = vunpack.c.h.b16 %v1485
      %v1837 = vunpack.c.l.b16 %v1486
      %v1838 = vunpack.c.h.b16 %v1486
      %v1839 = vunpack.c.l.b16 %v1487
      %v1840 = vunpack.c.l.b16 %v1488
      %v1841 = vunpack.c.h.b16 %v1488
      %v1842 = vunpack.c.l.b16 %v1489
      %v1843 = vunpack.c.h.b16 %v1489
      %v1844 = vunpack.c.l.b16 %v1490
      %v1845 = vunpack.c.h.b16 %v1490
      %v1846 = vunpack.c.l.b16 %v1491
      %v1847 = vunpack.c.h.b16 %v1491
      %v1848 = vunpack.c.l.b16 %v1492
      %v1849 = vunpack.c.l.b16 %v1493
      %v1850 = vunpack.c.h.b16 %v1493
      %v1851 = vunpack.c.l.b16 %v1494
      %v1852 = vunpack.c.h.b16 %v1494
      %v1853 = vunpack.c.l.b16 %v1495
      %v1854 = vunpack.c.h.b16 %v1495
      %v1855 = vunpack.c.l.b16 %v1496
      %v1856 = vunpack.c.h.b16 %v1496
      %v1857 = vunpack.c.l.b16 %v1497
      %v1858 = vunpack.c.l.b16 %v1498
      %v1859 = vunpack.c.h.b16 %v1498
      %v1860 = vunpack.c.l.b16 %v1499
      %v1861 = vunpack.c.h.b16 %v1499
      %v1862 = vunpack.c.l.b16 %v1500
      %v1863 = vunpack.c.h.b16 %v1500
      %v1864 = vunpack.c.l.b16 %v1501
      %v1865 = vunpack.c.h.b16 %v1501
      %v1866 = vunpack.c.l.b16 %v1502
      %v1867 = vunpack.c.l.b16 %v1503
      %v1868 = vunpack.c.h.b16 %v1503
      %v1869 = vunpack.c.l.b16 %v1504
      %v1870 = vunpack.c.h.b16 %v1504
      %v1871 = vunpack.c.l.b16 %v1505
      %v1872 = vunpack.c.h.b16 %v1505
      %v1873 = vunpack.c.l.b16 %v1506
      %v1874 = vunpack.c.h.b16 %v1506
      %v1875 = vunpack.c.l.b16 %v1507
      %v1876 = vunpack.c.l.b16 %v1508
      %v1877 = vunpack.c.h.b16 %v1508
      %v1878 = vunpack.c.l.b16 %v1509
      %v1879 = vunpack.c.h.b16 %v1509
      %v1880 = vunpack.c.l.b16 %v1510
      %v1881 = vunpack.c.h.b16 %v1510
      %v1882 = vunpack.c.l.b16 %v1511
      %v1883 = vunpack.c.h.b16 %v1511
      %v1884 = vunpack.c.l.b16 %v1512
      %v1885 = vpack.c.b16 %v1750, %v1741
      %v1886 = vpack.c.b16 %v1751, %v1742
      %v1887 = vpack.c.b16 %v1752, %v1743
      %v1888 = vpack.c.b16 %v1753, %v1744
      %v1889 = vpack.c.b16 %v1754, %v1745
      %v1890 = vpack.c.b16 %v1755, %v1746
      %v1891 = vpack.c.b16 %v1756, %v1747
      %v1892 = vpack.c.b16 %v1757, %v1748
      %v1893 = vpack.c.b16 %v1758, %v1749
      %v1894 = vpack.c.b16 %v1768, %v1759
      %v1895 = vpack.c.b16 %v1769, %v1760
      %v1896 = vpack.c.b16 %v1770, %v1761
      %v1897 = vpack.c.b16 %v1771, %v1762
      %v1898 = vpack.c.b16 %v1772, %v1763
      %v1899 = vpack.c.b16 %v1773, %v1764
      %v1900 = vpack.c.b16 %v1774, %v1765
      %v1901 = vpack.c.b16 %v1775, %v1766
      %v1902 = vpack.c.b16 %v1776, %v1767
      %v1903 = vpack.c.b16 %v1786, %v1777
      %v1904 = vpack.c.b16 %v1787, %v1778
      %v1905 = vpack.c.b16 %v1788, %v1779
      %v1906 = vpack.c.b16 %v1789, %v1780
      %v1907 = vpack.c.b16 %v1790, %v1781
      %v1908 = vpack.c.b16 %v1791, %v1782
      %v1909 = vpack.c.b16 %v1792, %v1783
      %v1910 = vpack.c.b16 %v1793, %v1784
      %v1911 = vpack.c.b16 %v1794, %v1785
      %v1912 = vpack.c.b16 %v1804, %v1795
      %v1913 = vpack.c.b16 %v1805, %v1796
      %v1914 = vpack.c.b16 %v1806, %v1797
      %v1915 = vpack.c.b16 %v1807, %v1798
      %v1916 = vpack.c.b16 %v1808, %v1799
      %v1917 = vpack.c.b16 %v1809, %v1800
      %v1918 = vpack.c.b16 %v1810, %v1801
      %v1919 = vpack.c.b16 %v1811, %v1802
      %v1920 = vpack.c.b16 %v1812, %v1803
      %v1921 = vpack.c.b16 %v1822, %v1813
      %v1922 = vpack.c.b16 %v1823, %v1814
      %v1923 = vpack.c.b16 %v1824, %v1815
      %v1924 = vpack.c.b16 %v1825, %v1816
      %v1925 = vpack.c.b16 %v1826, %v1817
      %v1926 = vpack.c.b16 %v1827, %v1818
      %v1927 = vpack.c.b16 %v1828, %v1819
      %v1928 = vpack.c.b16 %v1829, %v1820
      %v1929 = vpack.c.b16 %v1830, %v1821
      %v1930 = vpack.c.b16 %v1840, %v1831
      %v1931 = vpack.c.b16 %v1841, %v1832
      %v1932 = vpack.c.b16 %v1842, %v1833
      %v1933 = vpack.c.b16 %v1843, %v1834
      %v1934 = vpack.c.b16 %v1844, %v1835
      %v1935 = vpack.c.b16 %v1845, %v1836
      %v1936 = vpack.c.b16 %v1846, %v1837
      %v1937 = vpack.c.b16 %v1847, %v1838
      %v1938 = vpack.c.b16 %v1848, %v1839
      %v1939 = vpack.c.b16 %v1858, %v1849
      %v1940 = vpack.c.b16 %v1859, %v1850
      %v1941 = vpack.c.b16 %v1860, %v1851
      %v1942 = vpack.c.b16 %v1861, %v1852
      %v1943 = vpack.c.b16 %v1862, %v1853
      %v1944 = vpack.c.b16 %v1863, %v1854
      %v1945 = vpack.c.b16 %v1864, %v1855
      %v1946 = vpack.c.b16 %v1865, %v1856
      %v1947 = vpack.c.b16 %v1866, %v1857
      %v1948 = vpack.c.b16 %v1876, %v1867
      %v1949 = vpack.c.b16 %v1877, %v1868
      %v1950 = vpack.c.b16 %v1878, %v1869
      %v1951 = vpack.c.b16 %v1879, %v1870
      %v1952 = vpack.c.b16 %v1880, %v1871
      %v1953 = vpack.c.b16 %v1881, %v1872
      %v1954 = vpack.c.b16 %v1882, %v1873
      %v1955 = vpack.c.b16 %v1883, %v1874
      %v1956 = vpack.c.b16 %v1884, %v1875
      %v2173 = vunpack.c.l.b16 %v1513
      %v2174 = vunpack.c.l.b16 %v1514
      %v2175 = vunpack.c.l.b16 %v1515
      %v2176 = vunpack.c.l.b16 %v1516
      %v2177 = vunpack.c.l.b16 %v1517
      %v2178 = vunpack.c.l.b16 %v1518
      %v2179 = vunpack.c.l.b16 %v1519
      %v2180 = vunpack.c.l.b16 %v1520
      %v2181 = vunpack.c.l.b16 %v1521
      %v2182 = vunpack.c.l.b16 %v1522
      %v2183 = vunpack.c.l.b16 %v1523
      %v2184 = vunpack.c.l.b16 %v1524
      %v2185 = vunpack.c.l.b16 %v1525
      %v2186 = vunpack.c.l.b16 %v1526
      %v2187 = vunpack.c.l.b16 %v1527
      %v2188 = vunpack.c.l.b16 %v1528
      %v2189 = vunpack.c.l.b16 %v1529
      %v2190 = vunpack.c.l.b16 %v1530
      %v2191 = vunpack.c.l.b16 %v1531
      %v2192 = vunpack.c.l.b16 %v1532
      %v2193 = vunpack.c.l.b16 %v1533
      %v2194 = vunpack.c.l.b16 %v1534
      %v2195 = vunpack.c.l.b16 %v1535
      %v2196 = vunpack.c.l.b16 %v1536
      %v2197 = vunpack.c.l.b16 %v1537
      %v2198 = vunpack.c.l.b16 %v1538
      %v2199 = vunpack.c.l.b16 %v1539
      %v2200 = vunpack.c.l.b16 %v1540
      %v2201 = vunpack.c.l.b16 %v1541
      %v2202 = vunpack.c.l.b16 %v1542
      %v2203 = vunpack.c.l.b16 %v1543
      %v2204 = vunpack.c.l.b16 %v1544
      %v2205 = vunpack.c.l.b16 %v1545
      %v2206 = vunpack.c.l.b16 %v1546
      %v2207 = vunpack.c.l.b16 %v1547
      %v2208 = vunpack.c.l.b16 %v1548
      %v2209 = vunpack.c.l.b16 %v1549
      %v2210 = vunpack.c.l.b16 %v1550
      %v2211 = vunpack.c.l.b16 %v1551
      %v2212 = vunpack.c.l.b16 %v1552
      %v2213 = vunpack.c.l.b16 %v1553
      %v2214 = vunpack.c.l.b16 %v1554
      %v2215 = vunpack.c.l.b16 %v1555
      %v2216 = vunpack.c.l.b16 %v1556
      %v2217 = vunpack.c.l.b16 %v1557
      %v2218 = vunpack.c.l.b16 %v1558
      %v2219 = vunpack.c.l.b16 %v1559
      %v2220 = vunpack.c.l.b16 %v1560
      %v2221 = vunpack.c.l.b16 %v1561
      %v2222 = vunpack.c.l.b16 %v1562
      %v2223 = vunpack.c.l.b16 %v1563
      %v2224 = vunpack.c.l.b16 %v1564
      %v2225 = vunpack.c.l.b16 %v1565
      %v2226 = vunpack.c.l.b16 %v1566
      %v2227 = vunpack.c.l.b16 %v1567
      %v2228 = vunpack.c.l.b16 %v1568
      %v2229 = vunpack.c.l.b16 %v1569
      %v2230 = vunpack.c.l.b16 %v1570
      %v2231 = vunpack.c.l.b16 %v1571
      %v2232 = vunpack.c.l.b16 %v1572
      %v2233 = vunpack.c.l.b16 %v1573
      %v2234 = vunpack.c.l.b16 %v1574
      %v2235 = vunpack.c.l.b16 %v1575
      %v2236 = vunpack.c.l.b16 %v1576
      %v2237 = vunpack.c.l.b16 %v1577
      %v2238 = vunpack.c.l.b16 %v1578
      %v2239 = vunpack.c.l.b16 %v1579
      %v2240 = vunpack.c.l.b16 %v1580
      %v2241 = vunpack.c.l.b16 %v1581
      %v2242 = vunpack.c.l.b16 %v1582
      %v2243 = vunpack.c.l.b16 %v1583
      %v2244 = vunpack.c.l.b16 %v1584
      %v2245 = vunpack.c.l.b16 %v1585
      %v2246 = vunpack.c.l.b16 %v1586
      %v2247 = vunpack.c.l.b16 %v1587
      %v2248 = vunpack.c.l.b16 %v1588
      %v2249 = vunpack.c.l.b16 %v1589
      %v2250 = vunpack.c.l.b16 %v1590
      %v2251 = vunpack.c.l.b16 %v1591
      %v2252 = vunpack.c.l.b16 %v1592
      %v2253 = vunpack.c.l.b16 %v1593
      %v2254 = vunpack.c.l.b16 %v1594
      %v2255 = vunpack.c.l.b16 %v1595
      %v2256 = vunpack.c.l.b16 %v1596
      %v2257 = vunpack.c.l.b16 %v1597
      %v2258 = vunpack.c.l.b16 %v1598
      %v2259 = vunpack.c.l.b16 %v1599
      %v2260 = vunpack.c.l.b16 %v1600
      %v2261 = vunpack.c.l.b16 %v1601
      %v2262 = vunpack.c.l.b16 %v1602
      %v2263 = vunpack.c.l.b16 %v1603
      %v2264 = vunpack.c.l.b16 %v1604
      %v2265 = vunpack.c.l.b16 %v1605
      %v2266 = vunpack.c.l.b16 %v1606
      %v2267 = vunpack.c.l.b16 %v1607
      %v2268 = vunpack.c.l.b16 %v1608
      %v2269 = vunpack.c.l.b16 %v1609
      %v2270 = vunpack.c.l.b16 %v1610
      %v2271 = vunpack.c.l.b16 %v1611
      %v2272 = vunpack.c.l.b16 %v1612
      %v2273 = vunpack.c.l.b16 %v1613
      %v2274 = vunpack.c.l.b16 %v1614
      %v2275 = vunpack.c.l.b16 %v1615
      %v2276 = vunpack.c.l.b16 %v1616
      %v2277 = vunpack.c.l.b16 %v1617
      %v2278 = vunpack.c.l.b16 %v1618
      %v2279 = vunpack.c.l.b16 %v1619
      %v2280 = vunpack.c.l.b16 %v1620
      %v2281 = vunpack.c.l.b16 %v1621
      %v2282 = vunpack.c.l.b16 %v1622
      %v2283 = vunpack.c.l.b16 %v1623
      %v2284 = vunpack.c.l.b16 %v1624
      %v2285 = vunpack.c.l.b16 %v1625
      %v2286 = vunpack.c.l.b16 %v1626
      %v2287 = vunpack.c.l.b16 %v1627
      %v2288 = vunpack.c.l.b16 %v1628
      %v2289 = vunpack.c.l.b16 %v1629
      %v2290 = vunpack.c.l.b16 %v1630
      %v2291 = vunpack.c.l.b16 %v1631
      %v2292 = vunpack.c.l.b16 %v1632
      %v2293 = vunpack.c.l.b16 %v1633
      %v2294 = vunpack.c.l.b16 %v1634
      %v2295 = vunpack.c.l.b16 %v1635
      %v2296 = vunpack.c.l.b16 %v1636
      %v2297 = vunpack.c.l.b16 %v1637
      %v2298 = vunpack.c.l.b16 %v1638
      %v2299 = vunpack.c.l.b16 %v1639
      %v2300 = vunpack.c.l.b16 %v1640
      %v2301 = vunpack.c.l.b16 %v1641
      %v2302 = vunpack.c.l.b16 %v1642
      %v2303 = vunpack.c.l.b16 %v1643
      %v2304 = vunpack.c.l.b16 %v1644
      %v2305 = vunpack.c.l.b16 %v1645
      %v2306 = vunpack.c.l.b16 %v1646
      %v2307 = vunpack.c.l.b16 %v1647
      %v2308 = vunpack.c.l.b16 %v1648
      %v2309 = vunpack.c.l.b16 %v1649
      %v2310 = vunpack.c.l.b16 %v1650
      %v2311 = vunpack.c.l.b16 %v1651
      %v2312 = vunpack.c.l.b16 %v1652
      %v2313 = vunpack.c.l.b16 %v1653
      %v2314 = vunpack.c.l.b16 %v1654
      %v2315 = vunpack.c.l.b16 %v1655
      %v2316 = vunpack.c.l.b16 %v1656
      %v2317 = vpack.c.b16 %v2174, %v2173
      %v2318 = vpack.c.b16 %v2176, %v2175
      %v2319 = vpack.c.b16 %v2178, %v2177
      %v2320 = vpack.c.b16 %v2180, %v2179
      %v2321 = vpack.c.b16 %v2182, %v2181
      %v2322 = vpack.c.b16 %v2184, %v2183
      %v2323 = vpack.c.b16 %v2186, %v2185
      %v2324 = vpack.c.b16 %v2188, %v2187
      %v2325 = vpack.c.b16 %v2190, %v2189
      %v2326 = vpack.c.b16 %v2192, %v2191
      %v2327 = vpack.c.b16 %v2194, %v2193
      %v2328 = vpack.c.b16 %v2196, %v2195
      %v2329 = vpack.c.b16 %v2198, %v2197
      %v2330 = vpack.c.b16 %v2200, %v2199
      %v2331 = vpack.c.b16 %v2202, %v2201
      %v2332 = vpack.c.b16 %v2204, %v2203
      %v2333 = vpack.c.b16 %v2206, %v2205
      %v2334 = vpack.c.b16 %v2208, %v2207
      %v2335 = vpack.c.b16 %v2210, %v2209
      %v2336 = vpack.c.b16 %v2212, %v2211
      %v2337 = vpack.c.b16 %v2214, %v2213
      %v2338 = vpack.c.b16 %v2216, %v2215
      %v2339 = vpack.c.b16 %v2218, %v2217
      %v2340 = vpack.c.b16 %v2220, %v2219
      %v2341 = vpack.c.b16 %v2222, %v2221
      %v2342 = vpack.c.b16 %v2224, %v2223
      %v2343 = vpack.c.b16 %v2226, %v2225
      %v2344 = vpack.c.b16 %v2228, %v2227
      %v2345 = vpack.c.b16 %v2230, %v2229
      %v2346 = vpack.c.b16 %v2232, %v2231
      %v2347 = vpack.c.b16 %v2234, %v2233
      %v2348 = vpack.c.b16 %v2236, %v2235
      %v2349 = vpack.c.b16 %v2238, %v2237
      %v2350 = vpack.c.b16 %v2240, %v2239
      %v2351 = vpack.c.b16 %v2242, %v2241
      %v2352 = vpack.c.b16 %v2244, %v2243
      %v2353 = vpack.c.b16 %v2246, %v2245
      %v2354 = vpack.c.b16 %v2248, %v2247
      %v2355 = vpack.c.b16 %v2250, %v2249
      %v2356 = vpack.c.b16 %v2252, %v2251
      %v2357 = vpack.c.b16 %v2254, %v2253
      %v2358 = vpack.c.b16 %v2256, %v2255
      %v2359 = vpack.c.b16 %v2258, %v2257
      %v2360 = vpack.c.b16 %v2260, %v2259
      %v2361 = vpack.c.b16 %v2262, %v2261
      %v2362 = vpack.c.b16 %v2264, %v2263
      %v2363 = vpack.c.b16 %v2266, %v2265
      %v2364 = vpack.c.b16 %v2268, %v2267
      %v2365 = vpack.c.b16 %v2270, %v2269
      %v2366 = vpack.c.b16 %v2272, %v2271
      %v2367 = vpack.c.b16 %v2274, %v2273
      %v2368 = vpack.c.b16 %v2276, %v2275
      %v2369 = vpack.c.b16 %v2278, %v2277
      %v2370 = vpack.c.b16 %v2280, %v2279
      %v2371 = vpack.c.b16 %v2282, %v2281
      %v2372 = vpack.c.b16 %v2284, %v2283
      %v2373 = vpack.c.b16 %v2286, %v2285
      %v2374 = vpack.c.b16 %v2288, %v2287
      %v2375 = vpack.c.b16 %v2290, %v2289
      %v2376 = vpack.c.b16 %v2292, %v2291
      %v2377 = vpack.c.b16 %v2294, %v2293
      %v2378 = vpack.c.b16 %v2296, %v2295
      %v2379 = vpack.c.b16 %v2298, %v2297
      %v2380 = vpack.c.b16 %v2300, %v2299
      %v2381 = vpack.c.b16 %v2302, %v2301
      %v2382 = vpack.c.b16 %v2304, %v2303
      %v2383 = vpack.c.b16 %v2306, %v2305
      %v2384 = vpack.c.b16 %v2308, %v2307
      %v2385 = vpack.c.b16 %v2310, %v2309
      %v2386 = vpack.c.b16 %v2312, %v2311
      %v2387 = vpack.c.b16 %v2314, %v2313
      %v2388 = vpack.c.b16 %v2316, %v2315
      %2461 = vmatpush.bf16.msra.mxu0 %v2324
      %2462 = vmatpush.bf16.msra.mxu0 %v2323
      %2463 = vmatpush.bf16.msra.mxu0 %v2322
      %2464 = vmatpush.bf16.msra.mxu0 %v2321
      %2465 = vmatpush.bf16.msra.mxu0 %v2320
      %2466 = vmatpush.bf16.msra.mxu0 %v2319
      %2467 = vmatpush.bf16.msra.mxu0 %v2318
      %2468 = vmatpush.bf16.msra.mxu0 %v2317
      %2469 = vmatmul.bf16.gmra.mxu0 %v1885
      %v2470 = vpop.f32.mrf.mxu0
      %v2471 = vadd.f32 %v1659, %v2470
      %v2472 = vpop.f32.mrf.mxu0
      %v2473 = vadd.f32 %v1659, %v2472
      %2474 = vmatmul.bf16.gmra.mxu0 %v1894
      %v2475 = vpop.f32.mrf.mxu0
      %v2476 = vadd.f32 %v1659, %v2475
      %v2477 = vpop.f32.mrf.mxu0
      %v2478 = vadd.f32 %v1659, %v2477
      %2479 = vmatmul.bf16.gmra.mxu0 %v1903
      %v2480 = vpop.f32.mrf.mxu0
      %v2481 = vadd.f32 %v1659, %v2480
      %v2482 = vpop.f32.mrf.mxu0
      %v2483 = vadd.f32 %v1659, %v2482
      %2484 = vmatmul.bf16.gmra.mxu0 %v1912
      %v2485 = vpop.f32.mrf.mxu0
      %v2486 = vadd.f32 %v1659, %v2485
      %v2487 = vpop.f32.mrf.mxu0
      %v2488 = vadd.f32 %v1659, %v2487
      %2489 = vmatmul.bf16.gmra.mxu0 %v1921
      %v2490 = vpop.f32.mrf.mxu0
      %v2491 = vadd.f32 %v1659, %v2490
      %v2492 = vpop.f32.mrf.mxu0
      %v2493 = vadd.f32 %v1659, %v2492
      %2494 = vmatmul.bf16.gmra.mxu0 %v1930
      %v2495 = vpop.f32.mrf.mxu0
      %v2496 = vadd.f32 %v1659, %v2495
      %v2497 = vpop.f32.mrf.mxu0
      %v2498 = vadd.f32 %v1659, %v2497
      %2499 = vmatmul.bf16.gmra.mxu0 %v1939
      %v2500 = vpop.f32.mrf.mxu0
      %v2501 = vadd.f32 %v1659, %v2500
      %v2502 = vpop.f32.mrf.mxu0
      %v2503 = vadd.f32 %v1659, %v2502
      %2504 = vmatmul.bf16.gmra.mxu0 %v1948
      %v2505 = vpop.f32.mrf.mxu0
      %v2506 = vadd.f32 %v1659, %v2505
      %v2507 = vpop.f32.mrf.mxu0
      %v2508 = vadd.f32 %v1659, %v2507
      %2509 = vdwg.mxu0
      %2510 = vmatpush.bf16.msra.mxu0 %v2332
      %2511 = vmatpush.bf16.msra.mxu0 %v2331
      %2512 = vmatpush.bf16.msra.mxu0 %v2330
      %2513 = vmatpush.bf16.msra.mxu0 %v2329
      %2514 = vmatpush.bf16.msra.mxu0 %v2328
      %2515 = vmatpush.bf16.msra.mxu0 %v2327
      %2516 = vmatpush.bf16.msra.mxu0 %v2326
      %2517 = vmatpush.bf16.msra.mxu0 %v2325
      %2518 = vmatmul.bf16.gmra.mxu0 %v1886
      %v2519 = vpop.f32.mrf.mxu0
      %v2520 = vadd.f32 %v2471, %v2519
      %v2521 = vpop.f32.mrf.mxu0
      %v2522 = vadd.f32 %v2473, %v2521
      %2523 = vmatmul.bf16.gmra.mxu0 %v1895
      %v2524 = vpop.f32.mrf.mxu0
      %v2525 = vadd.f32 %v2476, %v2524
      %v2526 = vpop.f32.mrf.mxu0
      %v2527 = vadd.f32 %v2478, %v2526
      %2528 = vmatmul.bf16.gmra.mxu0 %v1904
      %v2529 = vpop.f32.mrf.mxu0
      %v2530 = vadd.f32 %v2481, %v2529
      %v2531 = vpop.f32.mrf.mxu0
      %v2532 = vadd.f32 %v2483, %v2531
      %2533 = vmatmul.bf16.gmra.mxu0 %v1913
      %v2534 = vpop.f32.mrf.mxu0
      %v2535 = vadd.f32 %v2486, %v2534
      %v2536 = vpop.f32.mrf.mxu0
      %v2537 = vadd.f32 %v2488, %v2536
      %2538 = vmatmul.bf16.gmra.mxu0 %v1922
      %v2539 = vpop.f32.mrf.mxu0
      %v2540 = vadd.f32 %v2491, %v2539
      %v2541 = vpop.f32.mrf.mxu0
      %v2542 = vadd.f32 %v2493, %v2541
      %2543 = vmatmul.bf16.gmra.mxu0 %v1931
      %v2544 = vpop.f32.mrf.mxu0
      %v2545 = vadd.f32 %v2496, %v2544
      %v2546 = vpop.f32.mrf.mxu0
      %v2547 = vadd.f32 %v2498, %v2546
      %2548 = vmatmul.bf16.gmra.mxu0 %v1940
      %v2549 = vpop.f32.mrf.mxu0
      %v2550 = vadd.f32 %v2501, %v2549
      %v2551 = vpop.f32.mrf.mxu0
      %v2552 = vadd.f32 %v2503, %v2551
      %2553 = vmatmul.bf16.gmra.mxu0 %v1949
      %v2554 = vpop.f32.mrf.mxu0
      %v2555 = vadd.f32 %v2506, %v2554
      %v2556 = vpop.f32.mrf.mxu0
      %v2557 = vadd.f32 %v2508, %v2556
      %2558 = vdwg.mxu0
      %2559 = vmatpush.bf16.msra.mxu0 %v2340
      %2560 = vmatpush.bf16.msra.mxu0 %v2339
      %2561 = vmatpush.bf16.msra.mxu0 %v2338
      %2562 = vmatpush.bf16.msra.mxu0 %v2337
      %2563 = vmatpush.bf16.msra.mxu0 %v2336
      %2564 = vmatpush.bf16.msra.mxu0 %v2335
      %2565 = vmatpush.bf16.msra.mxu0 %v2334
      %2566 = vmatpush.bf16.msra.mxu0 %v2333
      %2567 = vmatmul.bf16.gmra.mxu0 %v1887
      %v2568 = vpop.f32.mrf.mxu0
      %v2569 = vadd.f32 %v2520, %v2568
      %v2570 = vpop.f32.mrf.mxu0
      %v2571 = vadd.f32 %v2522, %v2570
      %2572 = vmatmul.bf16.gmra.mxu0 %v1896
      %v2573 = vpop.f32.mrf.mxu0
      %v2574 = vadd.f32 %v2525, %v2573
      %v2575 = vpop.f32.mrf.mxu0
      %v2576 = vadd.f32 %v2527, %v2575
      %2577 = vmatmul.bf16.gmra.mxu0 %v1905
      %v2578 = vpop.f32.mrf.mxu0
      %v2579 = vadd.f32 %v2530, %v2578
      %v2580 = vpop.f32.mrf.mxu0
      %v2581 = vadd.f32 %v2532, %v2580
      %2582 = vmatmul.bf16.gmra.mxu0 %v1914
      %v2583 = vpop.f32.mrf.mxu0
      %v2584 = vadd.f32 %v2535, %v2583
      %v2585 = vpop.f32.mrf.mxu0
      %v2586 = vadd.f32 %v2537, %v2585
      %2587 = vmatmul.bf16.gmra.mxu0 %v1923
      %v2588 = vpop.f32.mrf.mxu0
      %v2589 = vadd.f32 %v2540, %v2588
      %v2590 = vpop.f32.mrf.mxu0
      %v2591 = vadd.f32 %v2542, %v2590
      %2592 = vmatmul.bf16.gmra.mxu0 %v1932
      %v2593 = vpop.f32.mrf.mxu0
      %v2594 = vadd.f32 %v2545, %v2593
      %v2595 = vpop.f32.mrf.mxu0
      %v2596 = vadd.f32 %v2547, %v2595
      %2597 = vmatmul.bf16.gmra.mxu0 %v1941
      %v2598 = vpop.f32.mrf.mxu0
      %v2599 = vadd.f32 %v2550, %v2598
      %v2600 = vpop.f32.mrf.mxu0
      %v2601 = vadd.f32 %v2552, %v2600
      %2602 = vmatmul.bf16.gmra.mxu0 %v1950
      %v2603 = vpop.f32.mrf.mxu0
      %v2604 = vadd.f32 %v2555, %v2603
      %v2605 = vpop.f32.mrf.mxu0
      %v2606 = vadd.f32 %v2557, %v2605
      %2607 = vdwg.mxu0
      %2608 = vmatpush.bf16.msra.mxu0 %v2348
      %2609 = vmatpush.bf16.msra.mxu0 %v2347
      %2610 = vmatpush.bf16.msra.mxu0 %v2346
      %2611 = vmatpush.bf16.msra.mxu0 %v2345
      %2612 = vmatpush.bf16.msra.mxu0 %v2344
      %2613 = vmatpush.bf16.msra.mxu0 %v2343
      %2614 = vmatpush.bf16.msra.mxu0 %v2342
      %2615 = vmatpush.bf16.msra.mxu0 %v2341
      %2616 = vmatmul.bf16.gmra.mxu0 %v1888
      %v2617 = vpop.f32.mrf.mxu0
      %v2618 = vadd.f32 %v2569, %v2617
      %v2619 = vpop.f32.mrf.mxu0
      %v2620 = vadd.f32 %v2571, %v2619
      %2621 = vmatmul.bf16.gmra.mxu0 %v1897
      %v2622 = vpop.f32.mrf.mxu0
      %v2623 = vadd.f32 %v2574, %v2622
      %v2624 = vpop.f32.mrf.mxu0
      %v2625 = vadd.f32 %v2576, %v2624
      %2626 = vmatmul.bf16.gmra.mxu0 %v1906
      %v2627 = vpop.f32.mrf.mxu0
      %v2628 = vadd.f32 %v2579, %v2627
      %v2629 = vpop.f32.mrf.mxu0
      %v2630 = vadd.f32 %v2581, %v2629
      %2631 = vmatmul.bf16.gmra.mxu0 %v1915
      %v2632 = vpop.f32.mrf.mxu0
      %v2633 = vadd.f32 %v2584, %v2632
      %v2634 = vpop.f32.mrf.mxu0
      %v2635 = vadd.f32 %v2586, %v2634
      %2636 = vmatmul.bf16.gmra.mxu0 %v1924
      %v2637 = vpop.f32.mrf.mxu0
      %v2638 = vadd.f32 %v2589, %v2637
      %v2639 = vpop.f32.mrf.mxu0
      %v2640 = vadd.f32 %v2591, %v2639
      %2641 = vmatmul.bf16.gmra.mxu0 %v1933
      %v2642 = vpop.f32.mrf.mxu0
      %v2643 = vadd.f32 %v2594, %v2642
      %v2644 = vpop.f32.mrf.mxu0
      %v2645 = vadd.f32 %v2596, %v2644
      %2646 = vmatmul.bf16.gmra.mxu0 %v1942
      %v2647 = vpop.f32.mrf.mxu0
      %v2648 = vadd.f32 %v2599, %v2647
      %v2649 = vpop.f32.mrf.mxu0
      %v2650 = vadd.f32 %v2601, %v2649
      %2651 = vmatmul.bf16.gmra.mxu0 %v1951
      %v2652 = vpop.f32.mrf.mxu0
      %v2653 = vadd.f32 %v2604, %v2652
      %v2654 = vpop.f32.mrf.mxu0
      %v2655 = vadd.f32 %v2606, %v2654
      %2656 = vdwg.mxu0
      %2657 = vmatpush.bf16.msra.mxu0 %v2356
      %2658 = vmatpush.bf16.msra.mxu0 %v2355
      %2659 = vmatpush.bf16.msra.mxu0 %v2354
      %2660 = vmatpush.bf16.msra.mxu0 %v2353
      %2661 = vmatpush.bf16.msra.mxu0 %v2352
      %2662 = vmatpush.bf16.msra.mxu0 %v2351
      %2663 = vmatpush.bf16.msra.mxu0 %v2350
      %2664 = vmatpush.bf16.msra.mxu0 %v2349
      %2665 = vmatmul.bf16.gmra.mxu0 %v1889
      %v2666 = vpop.f32.mrf.mxu0
      %v2667 = vadd.f32 %v2618, %v2666
      %v2668 = vpop.f32.mrf.mxu0
      %v2669 = vadd.f32 %v2620, %v2668
      %2670 = vmatmul.bf16.gmra.mxu0 %v1898
      %v2671 = vpop.f32.mrf.mxu0
      %v2672 = vadd.f32 %v2623, %v2671
      %v2673 = vpop.f32.mrf.mxu0
      %v2674 = vadd.f32 %v2625, %v2673
      %2675 = vmatmul.bf16.gmra.mxu0 %v1907
      %v2676 = vpop.f32.mrf.mxu0
      %v2677 = vadd.f32 %v2628, %v2676
      %v2678 = vpop.f32.mrf.mxu0
      %v2679 = vadd.f32 %v2630, %v2678
      %2680 = vmatmul.bf16.gmra.mxu0 %v1916
      %v2681 = vpop.f32.mrf.mxu0
      %v2682 = vadd.f32 %v2633, %v2681
      %v2683 = vpop.f32.mrf.mxu0
      %v2684 = vadd.f32 %v2635, %v2683
      %2685 = vmatmul.bf16.gmra.mxu0 %v1925
      %v2686 = vpop.f32.mrf.mxu0
      %v2687 = vadd.f32 %v2638, %v2686
      %v2688 = vpop.f32.mrf.mxu0
      %v2689 = vadd.f32 %v2640, %v2688
      %2690 = vmatmul.bf16.gmra.mxu0 %v1934
      %v2691 = vpop.f32.mrf.mxu0
      %v2692 = vadd.f32 %v2643, %v2691
      %v2693 = vpop.f32.mrf.mxu0
      %v2694 = vadd.f32 %v2645, %v2693
      %2695 = vmatmul.bf16.gmra.mxu0 %v1943
      %v2696 = vpop.f32.mrf.mxu0
      %v2697 = vadd.f32 %v2648, %v2696
      %v2698 = vpop.f32.mrf.mxu0
      %v2699 = vadd.f32 %v2650, %v2698
      %2700 = vmatmul.bf16.gmra.mxu0 %v1952
      %v2701 = vpop.f32.mrf.mxu0
      %v2702 = vadd.f32 %v2653, %v2701
      %v2703 = vpop.f32.mrf.mxu0
      %v2704 = vadd.f32 %v2655, %v2703
      %2705 = vdwg.mxu0
      %2706 = vmatpush.bf16.msra.mxu0 %v2364
      %2707 = vmatpush.bf16.msra.mxu0 %v2363
      %2708 = vmatpush.bf16.msra.mxu0 %v2362
      %2709 = vmatpush.bf16.msra.mxu0 %v2361
      %2710 = vmatpush.bf16.msra.mxu0 %v2360
      %2711 = vmatpush.bf16.msra.mxu0 %v2359
      %2712 = vmatpush.bf16.msra.mxu0 %v2358
      %2713 = vmatpush.bf16.msra.mxu0 %v2357
      %2714 = vmatmul.bf16.gmra.mxu0 %v1890
      %v2715 = vpop.f32.mrf.mxu0
      %v2716 = vadd.f32 %v2667, %v2715
      %v2717 = vpop.f32.mrf.mxu0
      %v2718 = vadd.f32 %v2669, %v2717
      %2719 = vmatmul.bf16.gmra.mxu0 %v1899
      %v2720 = vpop.f32.mrf.mxu0
      %v2721 = vadd.f32 %v2672, %v2720
      %v2722 = vpop.f32.mrf.mxu0
      %v2723 = vadd.f32 %v2674, %v2722
      %2724 = vmatmul.bf16.gmra.mxu0 %v1908
      %v2725 = vpop.f32.mrf.mxu0
      %v2726 = vadd.f32 %v2677, %v2725
      %v2727 = vpop.f32.mrf.mxu0
      %v2728 = vadd.f32 %v2679, %v2727
      %2729 = vmatmul.bf16.gmra.mxu0 %v1917
      %v2730 = vpop.f32.mrf.mxu0
      %v2731 = vadd.f32 %v2682, %v2730
      %v2732 = vpop.f32.mrf.mxu0
      %v2733 = vadd.f32 %v2684, %v2732
      %2734 = vmatmul.bf16.gmra.mxu0 %v1926
      %v2735 = vpop.f32.mrf.mxu0
      %v2736 = vadd.f32 %v2687, %v2735
      %v2737 = vpop.f32.mrf.mxu0
      %v2738 = vadd.f32 %v2689, %v2737
      %2739 = vmatmul.bf16.gmra.mxu0 %v1935
      %v2740 = vpop.f32.mrf.mxu0
      %v2741 = vadd.f32 %v2692, %v2740
      %v2742 = vpop.f32.mrf.mxu0
      %v2743 = vadd.f32 %v2694, %v2742
      %2744 = vmatmul.bf16.gmra.mxu0 %v1944
      %v2745 = vpop.f32.mrf.mxu0
      %v2746 = vadd.f32 %v2697, %v2745
      %v2747 = vpop.f32.mrf.mxu0
      %v2748 = vadd.f32 %v2699, %v2747
      %2749 = vmatmul.bf16.gmra.mxu0 %v1953
      %v2750 = vpop.f32.mrf.mxu0
      %v2751 = vadd.f32 %v2702, %v2750
      %v2752 = vpop.f32.mrf.mxu0
      %v2753 = vadd.f32 %v2704, %v2752
      %2754 = vdwg.mxu0
      %2755 = vmatpush.bf16.msra.mxu0 %v2372
      %2756 = vmatpush.bf16.msra.mxu0 %v2371
      %2757 = vmatpush.bf16.msra.mxu0 %v2370
      %2758 = vmatpush.bf16.msra.mxu0 %v2369
      %2759 = vmatpush.bf16.msra.mxu0 %v2368
      %2760 = vmatpush.bf16.msra.mxu0 %v2367
      %2761 = vmatpush.bf16.msra.mxu0 %v2366
      %2762 = vmatpush.bf16.msra.mxu0 %v2365
      %2763 = vmatmul.bf16.gmra.mxu0 %v1891
      %v2764 = vpop.f32.mrf.mxu0
      %v2765 = vadd.f32 %v2716, %v2764
      %v2766 = vpop.f32.mrf.mxu0
      %v2767 = vadd.f32 %v2718, %v2766
      %2768 = vmatmul.bf16.gmra.mxu0 %v1900
      %v2769 = vpop.f32.mrf.mxu0
      %v2770 = vadd.f32 %v2721, %v2769
      %v2771 = vpop.f32.mrf.mxu0
      %v2772 = vadd.f32 %v2723, %v2771
      %2773 = vmatmul.bf16.gmra.mxu0 %v1909
      %v2774 = vpop.f32.mrf.mxu0
      %v2775 = vadd.f32 %v2726, %v2774
      %v2776 = vpop.f32.mrf.mxu0
      %v2777 = vadd.f32 %v2728, %v2776
      %2778 = vmatmul.bf16.gmra.mxu0 %v1918
      %v2779 = vpop.f32.mrf.mxu0
      %v2780 = vadd.f32 %v2731, %v2779
      %v2781 = vpop.f32.mrf.mxu0
      %v2782 = vadd.f32 %v2733, %v2781
      %2783 = vmatmul.bf16.gmra.mxu0 %v1927
      %v2784 = vpop.f32.mrf.mxu0
      %v2785 = vadd.f32 %v2736, %v2784
      %v2786 = vpop.f32.mrf.mxu0
      %v2787 = vadd.f32 %v2738, %v2786
      %2788 = vmatmul.bf16.gmra.mxu0 %v1936
      %v2789 = vpop.f32.mrf.mxu0
      %v2790 = vadd.f32 %v2741, %v2789
      %v2791 = vpop.f32.mrf.mxu0
      %v2792 = vadd.f32 %v2743, %v2791
      %2793 = vmatmul.bf16.gmra.mxu0 %v1945
      %v2794 = vpop.f32.mrf.mxu0
      %v2795 = vadd.f32 %v2746, %v2794
      %v2796 = vpop.f32.mrf.mxu0
      %v2797 = vadd.f32 %v2748, %v2796
      %2798 = vmatmul.bf16.gmra.mxu0 %v1954
      %v2799 = vpop.f32.mrf.mxu0
      %v2800 = vadd.f32 %v2751, %v2799
      %v2801 = vpop.f32.mrf.mxu0
      %v2802 = vadd.f32 %v2753, %v2801
      %2803 = vdwg.mxu0
      %2804 = vmatpush.bf16.msra.mxu0 %v2380
      %2805 = vmatpush.bf16.msra.mxu0 %v2379
      %2806 = vmatpush.bf16.msra.mxu0 %v2378
      %2807 = vmatpush.bf16.msra.mxu0 %v2377
      %2808 = vmatpush.bf16.msra.mxu0 %v2376
      %2809 = vmatpush.bf16.msra.mxu0 %v2375
      %2810 = vmatpush.bf16.msra.mxu0 %v2374
      %2811 = vmatpush.bf16.msra.mxu0 %v2373
      %2812 = vmatmul.bf16.gmra.mxu0 %v1892
      %v2813 = vpop.f32.mrf.mxu0
      %v2814 = vadd.f32 %v2765, %v2813
      %v2815 = vpop.f32.mrf.mxu0
      %v2816 = vadd.f32 %v2767, %v2815
      %2817 = vmatmul.bf16.gmra.mxu0 %v1901
      %v2818 = vpop.f32.mrf.mxu0
      %v2819 = vadd.f32 %v2770, %v2818
      %v2820 = vpop.f32.mrf.mxu0
      %v2821 = vadd.f32 %v2772, %v2820
      %2822 = vmatmul.bf16.gmra.mxu0 %v1910
      %v2823 = vpop.f32.mrf.mxu0
      %v2824 = vadd.f32 %v2775, %v2823
      %v2825 = vpop.f32.mrf.mxu0
      %v2826 = vadd.f32 %v2777, %v2825
      %2827 = vmatmul.bf16.gmra.mxu0 %v1919
      %v2828 = vpop.f32.mrf.mxu0
      %v2829 = vadd.f32 %v2780, %v2828
      %v2830 = vpop.f32.mrf.mxu0
      %v2831 = vadd.f32 %v2782, %v2830
      %2832 = vmatmul.bf16.gmra.mxu0 %v1928
      %v2833 = vpop.f32.mrf.mxu0
      %v2834 = vadd.f32 %v2785, %v2833
      %v2835 = vpop.f32.mrf.mxu0
      %v2836 = vadd.f32 %v2787, %v2835
      %2837 = vmatmul.bf16.gmra.mxu0 %v1937
      %v2838 = vpop.f32.mrf.mxu0
      %v2839 = vadd.f32 %v2790, %v2838
      %v2840 = vpop.f32.mrf.mxu0
      %v2841 = vadd.f32 %v2792, %v2840
      %2842 = vmatmul.bf16.gmra.mxu0 %v1946
      %v2843 = vpop.f32.mrf.mxu0
      %v2844 = vadd.f32 %v2795, %v2843
      %v2845 = vpop.f32.mrf.mxu0
      %v2846 = vadd.f32 %v2797, %v2845
      %2847 = vmatmul.bf16.gmra.mxu0 %v1955
      %v2848 = vpop.f32.mrf.mxu0
      %v2849 = vadd.f32 %v2800, %v2848
      %v2850 = vpop.f32.mrf.mxu0
      %v2851 = vadd.f32 %v2802, %v2850
      %2852 = vdwg.mxu0
      %2853 = vmatpush.bf16.msra.mxu0 %v2388
      %2854 = vmatpush.bf16.msra.mxu0 %v2387
      %2855 = vmatpush.bf16.msra.mxu0 %v2386
      %2856 = vmatpush.bf16.msra.mxu0 %v2385
      %2857 = vmatpush.bf16.msra.mxu0 %v2384
      %2858 = vmatpush.bf16.msra.mxu0 %v2383
      %2859 = vmatpush.bf16.msra.mxu0 %v2382
      %2860 = vmatpush.bf16.msra.mxu0 %v2381
      %2861 = vmatmul.bf16.gmra.mxu0 %v1893
      %v2862 = vpop.f32.mrf.mxu0
      %v2863 = vadd.f32 %v2814, %v2862
      %v2864 = vpop.f32.mrf.mxu0
      %v2865 = vadd.f32 %v2816, %v2864
      %2866 = vmatmul.bf16.gmra.mxu0 %v1902
      %v2867 = vpop.f32.mrf.mxu0
      %v2868 = vadd.f32 %v2819, %v2867
      %v2869 = vpop.f32.mrf.mxu0
      %v2870 = vadd.f32 %v2821, %v2869
      %2871 = vmatmul.bf16.gmra.mxu0 %v1911
      %v2872 = vpop.f32.mrf.mxu0
      %v2873 = vadd.f32 %v2824, %v2872
      %v2874 = vpop.f32.mrf.mxu0
      %v2875 = vadd.f32 %v2826, %v2874
      %2876 = vmatmul.bf16.gmra.mxu0 %v1920
      %v2877 = vpop.f32.mrf.mxu0
      %v2878 = vadd.f32 %v2829, %v2877
      %v2879 = vpop.f32.mrf.mxu0
      %v2880 = vadd.f32 %v2831, %v2879
      %2881 = vmatmul.bf16.gmra.mxu0 %v1929
      %v2882 = vpop.f32.mrf.mxu0
      %v2883 = vadd.f32 %v2834, %v2882
      %v2884 = vpop.f32.mrf.mxu0
      %v2885 = vadd.f32 %v2836, %v2884
      %2886 = vmatmul.bf16.gmra.mxu0 %v1938
      %v2887 = vpop.f32.mrf.mxu0
      %v2888 = vadd.f32 %v2839, %v2887
      %v2889 = vpop.f32.mrf.mxu0
      %v2890 = vadd.f32 %v2841, %v2889
      %2891 = vmatmul.bf16.gmra.mxu0 %v1947
      %v2892 = vpop.f32.mrf.mxu0
      %v2893 = vadd.f32 %v2844, %v2892
      %v2894 = vpop.f32.mrf.mxu0
      %v2895 = vadd.f32 %v2846, %v2894
      %2896 = vmatmul.bf16.gmra.mxu0 %v1956
      %v2897 = vpop.f32.mrf.mxu0
      %v2898 = vadd.f32 %v2849, %v2897
      %v2899 = vpop.f32.mrf.mxu0
      %v2900 = vadd.f32 %v2851, %v2899
      %2901 = vdwg.mxu0
      %v2902 = vpack.c.bf16 %v2863, %v2863
      %v2903 = vpack.c.bf16 %v2865, %v2865
      %v2904 = vpack.c.bf16 %v2868, %v2868
      %v2905 = vpack.c.bf16 %v2870, %v2870
      %v2906 = vpack.c.bf16 %v2873, %v2873
      %v2907 = vpack.c.bf16 %v2875, %v2875
      %v2908 = vpack.c.bf16 %v2878, %v2878
      %v2909 = vpack.c.bf16 %v2880, %v2880
      %v2910 = vpack.c.bf16 %v2883, %v2883
      %v2911 = vpack.c.bf16 %v2885, %v2885
      %v2912 = vpack.c.bf16 %v2888, %v2888
      %v2913 = vpack.c.bf16 %v2890, %v2890
      %v2914 = vpack.c.bf16 %v2893, %v2893
      %v2915 = vpack.c.bf16 %v2895, %v2895
      %v2916 = vpack.c.bf16 %v2898, %v2898
      %v2917 = vpack.c.bf16 %v2900, %v2900
      %2918 = vst [vmem:[%s192] sm:$0xf] %v2902
      %2919 = vst [vmem:[%s192 + $0x4] sm:$0xf] %v2903
      %2920 = vst [vmem:[%s192 + $0x8] sm:$0xf] %v2904
      %2921 = vst [vmem:[%s192 + $0xc] sm:$0xf] %v2905
      %2922 = vst [vmem:[%s192 + $0x10] sm:$0xf] %v2906
      %2923 = vst [vmem:[%s192 + $0x14] sm:$0xf] %v2907
      %2924 = vst [vmem:[%s192 + $0x18] sm:$0xf] %v2908
      %2925 = vst [vmem:[%s192 + $0x1c] sm:$0xf] %v2909
      %2926 = vst [vmem:[%s192 + $0x20] sm:$0xf] %v2910
      %2927 = vst [vmem:[%s192 + $0x24] sm:$0xf] %v2911
      %2928 = vst [vmem:[%s192 + $0x28] sm:$0xf] %v2912
      %2929 = vst [vmem:[%s192 + $0x2c] sm:$0xf] %v2913
      %2930 = vst [vmem:[%s192 + $0x30] sm:$0xf] %v2914
      %2931 = vst [vmem:[%s192 + $0x34] sm:$0xf] %v2915
      %2932 = vst [vmem:[%s192 + $0x38] sm:$0xf] %v2916
      %2933 = vst [vmem:[%s192 + $0x3c] sm:$0xf] %v2917
      %s2934 = smul.u32 16, %s19
      %p2935 = scmp.lt.s32.totalorder %s18, 1
      %s2936 = scalar_select %p2935, %s18, 1
      %p2937 = scmp.lt.s32.totalorder %s2934, 31
      %s2938 = scalar_select %p2937, %s2934, 31
      %s2939 = smul.addr %s2936, 32
      %s2940 = sadd.s32 %s2938, %s2939
      %s2941 = smul.addr %s2940, 4
      %s2942 = scalar_lea.vmem %s3, %s2941
      // Predicated region
      $region37: #{aspp_forward.1} parent=31 // pred_check
        %p2943 = pneg %p114
      $region38: #{aspp_forward.1} parent=31 // pred_check_branch
        %2945 = sbr.rel (%p2943) target = $region40
      $region39: #{aspp_forward.1} parent=31 // pred_region
        %s2946 = smul.u32 16, %s19
      $region40: #{aspp_forward.1} parent=31 // pred_fallthru
        _
    $region32: #{aspp_forward.1} parent=5 // pred_fallthru
      _
    %p2947 = scmp.le.s32.totalorder 2, %s9
    // Predicated region
    $region41: #{aspp_forward.1} parent=5 // pred_check
      %p2948 = pneg %p2947
    $region42: #{aspp_forward.1} parent=5 // pred_check_branch
      %2950 = sbr.rel (%p2948) target = $region44
    $region43: #{aspp_forward.1} parent=5 // pred_region
      %s2951 = ssub.s32 %s9, 2
      // Predicated region
      $region45: #{aspp_forward.1} parent=43 // pred_check
        %p2952 = pneg %p120
      $region46: #{aspp_forward.1} parent=43 // pred_check_branch
        %2954 = sbr.rel (%p2952) target = $region48
      $region47: #{aspp_forward.1} parent=43 // pred_region
        %s2955 = smul.u32 16, %s21
        %p2956 = scmp.lt.s32.totalorder %s20, 1
        %s2957 = scalar_select %p2956, %s20, 1
        %p2958 = scmp.lt.s32.totalorder %s2955, 31
        %s2959 = scalar_select %p2958, %s2955, 31
        %s2960 = smul.addr %s2957, 32
        %s2961 = sadd.s32 %s2959, %s2960
        %s2962 = smul.addr %s2961, 4
        %s2963 = scalar_lea.vmem %s3, %s2962
      $region48: #{aspp_forward.1} parent=43 // pred_fallthru
        _
    $region44: #{aspp_forward.1} parent=5 // pred_fallthru
      _
  $region6: #{aspp_forward.1} parent=0 // loop_footer
    %s13 = sadd.s32 1, %s9
  $region7: #{aspp_forward.1} parent=0 // loop_footer_branch
    %8 = sbr.rel target = $region3
  $region8: #{aspp_forward.1} parent=0 // loop_exit
    _

</llo_original>
